<compile_context>
chip_gen: v6e
topology: v6e:2x2x1
jax: 0.10.0
libtpu: 0.0.40
codegen_flags: <defaults>
</compile_context>

<pallas_src>
import numpy as np

import jax
import jax.numpy as jnp
from jax import lax
from jax.experimental import pallas as pl
from jax.experimental.pallas import tpu as pltpu


# ------------------------------ fused kernel --------------------------------

def _lenet_kernel(x4_ref, w1_ref, b1_ref, w2_ref, b2_ref,
                  wf1_ref, bf1_ref, wf2_ref, bf2_ref, wf3_ref, bf3_ref,
                  out_ref):
    # x4_ref: (7, 7, NB, 16) = space-to-depth(4) of the 28x28 input, spatial-
    # major:  x4[hh, ww, n, 4*h4 + w4] = x[n, 4*hh + h4, 4*ww + w4].
    x4 = x4_ref[...]
    nb = x4.shape[2]

    # ---- conv1 (+bias): one matmul row = a 4x4 block of conv1 output pixels.
    # patches: rows (ph2, pw2, n); lanes (u1, v1, h4, w4) = the 64 taps of the
    # 8x8 receptive field of the block rooted at (4*ph2, 4*pw2).
    p1 = jnp.concatenate(
        [x4[u1:u1 + 6, v1:v1 + 6, :, :] for u1 in range(2) for v1 in range(2)],
        axis=-1).reshape(36 * nb, 64)
    # w1_ref: (64, 96); output lanes = (a, b, dh, dw, co) -> conv1 output pixel
    # (4*ph2 + 2a + dh, 4*pw2 + 2b + dw), channel co.
    y1 = jnp.dot(p1, w1_ref[...], preferred_element_type=jnp.float32) + b1_ref[...]

    # ---- 2x2 max-pool + relu = max over the (dh, dw) lane groups.
    pooled = []
    for g in range(4):                       # g = a*2 + b  (pooled pixel in block)
        base = g * 24
        m = jnp.maximum(
            jnp.maximum(y1[:, base:base + 6],       y1[:, base + 6:base + 12]),
            jnp.maximum(y1[:, base + 12:base + 18], y1[:, base + 18:base + 24]))
        pooled.append(m)
    # s1: rows (ph2, pw2, n); lanes (a, b, co) = space-to-depth(2) of pool1 out.
    s1 = jnp.maximum(jnp.concatenate(pooled, axis=-1), 0.0).reshape(6, 6, nb, 24)

    # ---- conv2 (+bias): one matmul row = a 2x2 block of conv2 output pixels.
    # patches: rows (qh, qw, n); lanes (u1, v1, a, b, ci) = 216 taps of the
    # 6x6 (x 6 input channels) receptive field of the block.
    p2 = jnp.concatenate(
        [s1[u1:u1 + 4, v1:v1 + 4, :, :] for u1 in range(3) for v1 in range(3)],
        axis=-1).reshape(16 * nb, 216)
    # w2_ref: (216, 64); output lanes = (dh, dw, co).
    y2 = jnp.dot(p2, w2_ref[...], preferred_element_type=jnp.float32) + b2_ref[...]

    # ---- 2x2 max-pool + relu -> (16*NB, 16): rows (qh, qw, n), lanes co.
    s2 = jnp.maximum(
        jnp.maximum(jnp.maximum(y2[:, 0:16],  y2[:, 16:32]),
                    jnp.maximum(y2[:, 32:48], y2[:, 48:64])), 0.0)

    # ---- flatten to (NB, 256) with lane order (s, co), s = qh*4 + qw.
    s2 = s2.reshape(16, nb, 16)
    feats = jnp.concatenate([s2[s] for s in range(16)], axis=-1)

    # ---- fc1 -> relu -> fc2 -> relu -> fc3 (fc3 padded to 128 lanes).
    h1 = jnp.maximum(
        jnp.dot(feats, wf1_ref[...], preferred_element_type=jnp.float32)
        + bf1_ref[...], 0.0)
    h2 = jnp.maximum(
        jnp.dot(h1, wf2_ref[...], preferred_element_type=jnp.float32)
        + bf2_ref[...], 0.0)
    out_ref[...] = (
        jnp.dot(h2, wf3_ref[...], preferred_element_type=jnp.float32)
        + bf3_ref[...])


# ------------------------- one-time weight packing ---------------------------

def prepare_params(p):
    """Re-pack torch-layout LeNet params into kernel layout (run once, host)."""
    w1 = np.asarray(p["conv1_w"], np.float32)    # (6, 1, 5, 5)
    b1 = np.asarray(p["conv1_b"], np.float32)
    w2 = np.asarray(p["conv2_w"], np.float32)    # (16, 6, 5, 5)
    b2 = np.asarray(p["conv2_b"], np.float32)

    # conv1 blocked matmul weight: rows (u1, v1, h4, w4) with (u, v) = the tap
    # offset inside the 8x8 receptive field (u = 4*u1 + h4); cols (a, b, dh, dw,
    # co) with (2a+dh, 2b+dw) the output pixel inside the 4x4 block.
    w1blk = np.zeros((64, 96), np.float32)
    for u in range(8):
        for v in range(8):
            row = (u // 4 * 2 + v // 4) * 16 + (u % 4) * 4 + (v % 4)
            for a in range(2):
                for b in range(2):
                    for dh in range(2):
                        for dw in range(2):
                            i = u - (2 * a + dh)
                            j = v - (2 * b + dw)
                            if 0 <= i < 5 and 0 <= j < 5:
                                col = (((a * 2 + b) * 2 + dh) * 2 + dw) * 6
                                w1blk[row, col:col + 6] = w1[:, 0, i, j]
    b1blk = np.tile(b1, 16).reshape(1, 96)

    # conv2 blocked matmul weight: rows (u1, v1, a, b, ci), u = 2*u1 + a tap in
    # the 6x6 receptive field; cols (dh, dw, co) = pixel in the 2x2 block.
    w2blk = np.zeros((216, 64), np.float32)
    for u in range(6):
        for v in range(6):
            for ci in range(6):
                row = (u // 2 * 3 + v // 2) * 24 + ((u % 2) * 2 + (v % 2)) * 6 + ci
                for dh in range(2):
                    for dw in range(2):
                        i = u - dh
                        j = v - dw
                        if 0 <= i < 5 and 0 <= j < 5:
                            col = (dh * 2 + dw) * 16
                            w2blk[row, col:col + 16] = w2[:, ci, i, j]
    b2blk = np.tile(b2, 4).reshape(1, 64)

    # fc1: kernel feature order is (s, ci) with s = qh*4 + qw; torch is ci*16+s.
    fw1 = np.asarray(p["fc1_w"], np.float32)                       # (120, 256)
    wf1 = fw1.reshape(120, 16, 16).transpose(2, 1, 0).reshape(256, 120)
    bf1 = np.asarray(p["fc1_b"], np.float32).reshape(1, 120)
    wf2 = np.asarray(p["fc2_w"], np.float32).T                     # (120, 84)
    bf2 = np.asarray(p["fc2_b"], np.float32).reshape(1, 84)
    # fc3 padded to 128 output lanes -> lane-dense HBM store.
    wf3 = np.zeros((84, 128), np.float32)
    wf3[:, :10] = np.asarray(p["fc3_w"], np.float32).T
    bf3 = np.zeros((1, 128), np.float32)
    bf3[0, :10] = np.asarray(p["fc3_b"], np.float32)

    packed = dict(w1blk=w1blk, b1blk=b1blk, w2blk=w2blk, b2blk=b2blk,
                  wf1=wf1, bf1=bf1, wf2=wf2, bf2=bf2, wf3=wf3, bf3=bf3)
    return {k: jnp.asarray(v) for k, v in packed.items()}


# ------------------------------ forward wrapper ------------------------------

def lenet_forward(x_nchw, prep):
    """x_nchw: (N, 1, 28, 28) float32; prep: output of prepare_params()."""
    n = x_nchw.shape[0]
    nb = max(8, ((n + 7) // 8) * 8)          # pad batch to a sublane multiple
    x = jnp.pad(x_nchw.astype(jnp.float32),
                ((0, nb - n), (0, 0), (0, 0), (0, 0)))
    # space-to-depth(4), spatial-major: (7, 7, NB, 16). Pure layout glue on the
    # raw input; everything downstream stays in VMEM inside the fused kernel.
    x4 = jnp.transpose(x.reshape(nb, 7, 4, 7, 4),
                       (1, 3, 0, 2, 4)).reshape(7, 7, nb, 16)

    def full(shape):
        return pl.BlockSpec(shape, lambda i, _s=shape: (0,) * len(_s))

    out = pl.pallas_call(
        _lenet_kernel,
        out_shape=jax.ShapeDtypeStruct((nb, 128), jnp.float32),
        grid=(nb // 8,),
        in_specs=[
            pl.BlockSpec((7, 7, 8, 16), lambda i: (0, 0, i, 0)),
            full((64, 96)), full((1, 96)),
            full((216, 64)), full((1, 64)),
            full((256, 120)), full((1, 120)),
            full((120, 84)), full((1, 84)),
            full((84, 128)), full((1, 128)),
        ],
        out_specs=pl.BlockSpec((8, 128), lambda i: (i, 0)),
        compiler_params=pltpu.CompilerParams(
            dimension_semantics=("parallel",)),
    )(x4, prep["w1blk"], prep["b1blk"], prep["w2blk"], prep["b2blk"],
      prep["wf1"], prep["bf1"], prep["wf2"], prep["bf2"],
      prep["wf3"], prep["bf3"])
    return out[:n, :10]


# ------------------------------ init & reference -----------------------------

def init_params(key):
    # Deterministic init mimicking PyTorch default uniform(-1/sqrt(fan_in), +).
    ks = jax.random.split(key, 10)

    def u(k, shape, fan_in):
        bound = 1.0 / jnp.sqrt(jnp.float32(fan_in))
        return jax.random.uniform(k, shape, jnp.float32, -bound, bound)

    return {
        "conv1_w": u(ks[0], (6, 1, 5, 5), 1 * 5 * 5),
        "conv1_b": u(ks[1], (6,), 1 * 5 * 5),
        "conv2_w": u(ks[2], (16, 6, 5, 5), 6 * 5 * 5),
        "conv2_b": u(ks[3], (16,), 6 * 5 * 5),
        "fc1_w": u(ks[4], (120, 256), 256),
        "fc1_b": u(ks[5], (120,), 256),
        "fc2_w": u(ks[6], (84, 120), 120),
        "fc2_b": u(ks[7], (84,), 120),
        "fc3_w": u(ks[8], (10, 84), 84),
        "fc3_b": u(ks[9], (10,), 84),
    }


def lenet_reference(x, p):
    # Pure-JAX reference matching the PyTorch module (for correctness check).
    dn = ("NCHW", "OIHW", "NCHW")

    def pool2(y):
        n_, c_, h_, w_ = y.shape
        return y.reshape(n_, c_, h_ // 2, 2, w_ // 2, 2).max(axis=(3, 5))

    y = lax.conv_general_dilated(x, p["conv1_w"], (1, 1), "VALID",
                                 dimension_numbers=dn)
    y = jnp.maximum(pool2(y + p["conv1_b"].reshape(1, -1, 1, 1)), 0.0)
    y = lax.conv_general_dilated(y, p["conv2_w"], (1, 1), "VALID",
                                 dimension_numbers=dn)
    y = jnp.maximum(pool2(y + p["conv2_b"].reshape(1, -1, 1, 1)), 0.0)
    y = y.reshape(y.shape[0], 16 * 4 * 4)
    y = jnp.maximum(y @ p["fc1_w"].T + p["fc1_b"], 0.0)
    y = jnp.maximum(y @ p["fc2_w"].T + p["fc2_b"], 0.0)
    return y @ p["fc3_w"].T + p["fc3_b"]


if __name__ == "__main__":
    key = jax.random.PRNGKey(0)
    pkey, xkey = jax.random.split(key)
    params = init_params(pkey)
    prep = prepare_params(params)            # one-time weight re-layout (host)
    x = jax.random.normal(xkey, (2, 1, 28, 28), jnp.float32)

    fwd = jax.jit(lenet_forward)
    out = jax.block_until_ready(fwd(x, prep))
    assert out.shape == (2, 10) and out.dtype == jnp.float32

    ref = lenet_reference(x, params)
    err = float(jnp.max(jnp.abs(out - ref)))
    # Tolerance accounts for MXU bf16-pass rounding at default matmul precision.
    assert err < 1e-1, f"mismatch vs reference: max abs err = {err}"
    print("KERNEL_OK")
</pallas_src>

<mosaic_0001>
module attributes {stable_mosaic.version = 11 : i64} {
  func.func @_lenet_kernel(%arg0: i32, %arg1: memref<7x7x8x16xf32, #tpu.memory_space<vmem>>, %arg2: memref<64x96xf32, #tpu.memory_space<vmem>>, %arg3: memref<1x96xf32, #tpu.memory_space<vmem>>, %arg4: memref<216x64xf32, #tpu.memory_space<vmem>>, %arg5: memref<1x64xf32, #tpu.memory_space<vmem>>, %arg6: memref<256x120xf32, #tpu.memory_space<vmem>>, %arg7: memref<1x120xf32, #tpu.memory_space<vmem>>, %arg8: memref<120x84xf32, #tpu.memory_space<vmem>>, %arg9: memref<1x84xf32, #tpu.memory_space<vmem>>, %arg10: memref<84x128xf32, #tpu.memory_space<vmem>>, %arg11: memref<1x128xf32, #tpu.memory_space<vmem>>, %arg12: memref<8x128xf32, #tpu.memory_space<vmem>>) attributes {dimension_semantics = [#tpu.dimension_semantics<parallel>], iteration_bounds = array<i64: 1>, scalar_prefetch = 0 : i64, scratch_operands = 0 : i64, tpu.core_type = #tpu.core_type<tc>, window_params = [{transform_indices = @transform_0, window_bounds = array<i64: 7, 7, 8, 16>}, {pipeline_mode = #tpu.pipeline_mode<synchronous>, transform_indices = @transform_1, window_bounds = array<i64: 64, 96>}, {pipeline_mode = #tpu.pipeline_mode<synchronous>, transform_indices = @transform_2, window_bounds = array<i64: 1, 96>}, {pipeline_mode = #tpu.pipeline_mode<synchronous>, transform_indices = @transform_3, window_bounds = array<i64: 216, 64>}, {pipeline_mode = #tpu.pipeline_mode<synchronous>, transform_indices = @transform_4, window_bounds = array<i64: 1, 64>}, {pipeline_mode = #tpu.pipeline_mode<synchronous>, transform_indices = @transform_5, window_bounds = array<i64: 256, 120>}, {pipeline_mode = #tpu.pipeline_mode<synchronous>, transform_indices = @transform_6, window_bounds = array<i64: 1, 120>}, {pipeline_mode = #tpu.pipeline_mode<synchronous>, transform_indices = @transform_7, window_bounds = array<i64: 120, 84>}, {pipeline_mode = #tpu.pipeline_mode<synchronous>, transform_indices = @transform_8, window_bounds = array<i64: 1, 84>}, {pipeline_mode = #tpu.pipeline_mode<synchronous>, transform_indices = @transform_9, window_bounds = array<i64: 84, 128>}, {pipeline_mode = #tpu.pipeline_mode<synchronous>, transform_indices = @transform_10, window_bounds = array<i64: 1, 128>}, {transform_indices = @transform_11, window_bounds = array<i64: 8, 128>}]} {
    %c0 = arith.constant 0 : index
    %c0_0 = arith.constant 0 : index
    %c0_1 = arith.constant 0 : index
    %c0_2 = arith.constant 0 : index
    %0 = vector.load %arg1[%c0, %c0_0, %c0_1, %c0_2] : memref<7x7x8x16xf32, #tpu.memory_space<vmem>>, vector<7x7x8x16xf32>
    %1 = vector.extract_strided_slice %0 {offsets = [0, 0, 0, 0], sizes = [6, 6, 8, 16], strides = [1, 1, 1, 1]} : vector<7x7x8x16xf32> to vector<6x6x8x16xf32>
    %2 = vector.extract_strided_slice %0 {offsets = [0, 1, 0, 0], sizes = [6, 6, 8, 16], strides = [1, 1, 1, 1]} : vector<7x7x8x16xf32> to vector<6x6x8x16xf32>
    %3 = vector.extract_strided_slice %0 {offsets = [1, 0, 0, 0], sizes = [6, 6, 8, 16], strides = [1, 1, 1, 1]} : vector<7x7x8x16xf32> to vector<6x6x8x16xf32>
    %4 = vector.extract_strided_slice %0 {offsets = [1, 1, 0, 0], sizes = [6, 6, 8, 16], strides = [1, 1, 1, 1]} : vector<7x7x8x16xf32> to vector<6x6x8x16xf32>
    %5 = tpu.concatenate %1, %2, %3, %4 in 3 : vector<6x6x8x16xf32>, vector<6x6x8x16xf32>, vector<6x6x8x16xf32>, vector<6x6x8x16xf32> -> vector<6x6x8x64xf32>
    %6 = vector.shape_cast %5 : vector<6x6x8x64xf32> to vector<288x64xf32>
    %c0_3 = arith.constant 0 : index
    %c0_4 = arith.constant 0 : index
    %7 = vector.load %arg2[%c0_3, %c0_4] : memref<64x96xf32, #tpu.memory_space<vmem>>, vector<64x96xf32>
    %cst = arith.constant dense<0.000000e+00> : vector<288x96xf32>
    %8 = tpu.matmul %6, %7, %cst {dimension_numbers = #tpu.dot_dimension_numbers<[1], [0], [0], [1], [0, 0, 1, 1], [], []>} : vector<288x64xf32>, vector<64x96xf32>, vector<288x96xf32> -> vector<288x96xf32>
    %c0_5 = arith.constant 0 : index
    %c0_6 = arith.constant 0 : index
    %9 = vector.load %arg3[%c0_5, %c0_6] : memref<1x96xf32, #tpu.memory_space<vmem>>, vector<1x96xf32>
    %10 = vector.broadcast %9 : vector<1x96xf32> to vector<288x96xf32>
    %11 = arith.addf %8, %10 : vector<288x96xf32>
    %12 = vector.extract_strided_slice %11 {offsets = [0, 0], sizes = [288, 6], strides = [1, 1]} : vector<288x96xf32> to vector<288x6xf32>
    %13 = vector.extract_strided_slice %11 {offsets = [0, 6], sizes = [288, 6], strides = [1, 1]} : vector<288x96xf32> to vector<288x6xf32>
    %14 = arith.maximumf %12, %13 : vector<288x6xf32>
    %15 = vector.extract_strided_slice %11 {offsets = [0, 12], sizes = [288, 6], strides = [1, 1]} : vector<288x96xf32> to vector<288x6xf32>
    %16 = vector.extract_strided_slice %11 {offsets = [0, 18], sizes = [288, 6], strides = [1, 1]} : vector<288x96xf32> to vector<288x6xf32>
    %17 = arith.maximumf %15, %16 : vector<288x6xf32>
    %18 = arith.maximumf %14, %17 : vector<288x6xf32>
    %19 = vector.extract_strided_slice %11 {offsets = [0, 24], sizes = [288, 6], strides = [1, 1]} : vector<288x96xf32> to vector<288x6xf32>
    %20 = vector.extract_strided_slice %11 {offsets = [0, 30], sizes = [288, 6], strides = [1, 1]} : vector<288x96xf32> to vector<288x6xf32>
    %21 = arith.maximumf %19, %20 : vector<288x6xf32>
    %22 = vector.extract_strided_slice %11 {offsets = [0, 36], sizes = [288, 6], strides = [1, 1]} : vector<288x96xf32> to vector<288x6xf32>
    %23 = vector.extract_strided_slice %11 {offsets = [0, 42], sizes = [288, 6], strides = [1, 1]} : vector<288x96xf32> to vector<288x6xf32>
    %24 = arith.maximumf %22, %23 : vector<288x6xf32>
    %25 = arith.maximumf %21, %24 : vector<288x6xf32>
    %26 = vector.extract_strided_slice %11 {offsets = [0, 48], sizes = [288, 6], strides = [1, 1]} : vector<288x96xf32> to vector<288x6xf32>
    %27 = vector.extract_strided_slice %11 {offsets = [0, 54], sizes = [288, 6], strides = [1, 1]} : vector<288x96xf32> to vector<288x6xf32>
    %28 = arith.maximumf %26, %27 : vector<288x6xf32>
    %29 = vector.extract_strided_slice %11 {offsets = [0, 60], sizes = [288, 6], strides = [1, 1]} : vector<288x96xf32> to vector<288x6xf32>
    %30 = vector.extract_strided_slice %11 {offsets = [0, 66], sizes = [288, 6], strides = [1, 1]} : vector<288x96xf32> to vector<288x6xf32>
    %31 = arith.maximumf %29, %30 : vector<288x6xf32>
    %32 = arith.maximumf %28, %31 : vector<288x6xf32>
    %33 = vector.extract_strided_slice %11 {offsets = [0, 72], sizes = [288, 6], strides = [1, 1]} : vector<288x96xf32> to vector<288x6xf32>
    %34 = vector.extract_strided_slice %11 {offsets = [0, 78], sizes = [288, 6], strides = [1, 1]} : vector<288x96xf32> to vector<288x6xf32>
    %35 = arith.maximumf %33, %34 : vector<288x6xf32>
    %36 = vector.extract_strided_slice %11 {offsets = [0, 84], sizes = [288, 6], strides = [1, 1]} : vector<288x96xf32> to vector<288x6xf32>
    %37 = vector.extract_strided_slice %11 {offsets = [0, 90], sizes = [288, 6], strides = [1, 1]} : vector<288x96xf32> to vector<288x6xf32>
    %38 = arith.maximumf %36, %37 : vector<288x6xf32>
    %39 = arith.maximumf %35, %38 : vector<288x6xf32>
    %40 = tpu.concatenate %18, %25, %32, %39 in 1 : vector<288x6xf32>, vector<288x6xf32>, vector<288x6xf32>, vector<288x6xf32> -> vector<288x24xf32>
    %cst_7 = arith.constant 0.000000e+00 : f32
    %41 = vector.broadcast %cst_7 : f32 to vector<288x24xf32>
    %42 = arith.maximumf %40, %41 : vector<288x24xf32>
    %43 = vector.shape_cast %42 : vector<288x24xf32> to vector<6x6x8x24xf32>
    %44 = vector.extract_strided_slice %43 {offsets = [0, 0, 0, 0], sizes = [4, 4, 8, 24], strides = [1, 1, 1, 1]} : vector<6x6x8x24xf32> to vector<4x4x8x24xf32>
    %45 = vector.extract_strided_slice %43 {offsets = [0, 1, 0, 0], sizes = [4, 4, 8, 24], strides = [1, 1, 1, 1]} : vector<6x6x8x24xf32> to vector<4x4x8x24xf32>
    %46 = vector.extract_strided_slice %43 {offsets = [0, 2, 0, 0], sizes = [4, 4, 8, 24], strides = [1, 1, 1, 1]} : vector<6x6x8x24xf32> to vector<4x4x8x24xf32>
    %47 = vector.extract_strided_slice %43 {offsets = [1, 0, 0, 0], sizes = [4, 4, 8, 24], strides = [1, 1, 1, 1]} : vector<6x6x8x24xf32> to vector<4x4x8x24xf32>
    %48 = vector.extract_strided_slice %43 {offsets = [1, 1, 0, 0], sizes = [4, 4, 8, 24], strides = [1, 1, 1, 1]} : vector<6x6x8x24xf32> to vector<4x4x8x24xf32>
    %49 = vector.extract_strided_slice %43 {offsets = [1, 2, 0, 0], sizes = [4, 4, 8, 24], strides = [1, 1, 1, 1]} : vector<6x6x8x24xf32> to vector<4x4x8x24xf32>
    %50 = vector.extract_strided_slice %43 {offsets = [2, 0, 0, 0], sizes = [4, 4, 8, 24], strides = [1, 1, 1, 1]} : vector<6x6x8x24xf32> to vector<4x4x8x24xf32>
    %51 = vector.extract_strided_slice %43 {offsets = [2, 1, 0, 0], sizes = [4, 4, 8, 24], strides = [1, 1, 1, 1]} : vector<6x6x8x24xf32> to vector<4x4x8x24xf32>
    %52 = vector.extract_strided_slice %43 {offsets = [2, 2, 0, 0], sizes = [4, 4, 8, 24], strides = [1, 1, 1, 1]} : vector<6x6x8x24xf32> to vector<4x4x8x24xf32>
    %53 = tpu.concatenate %44, %45, %46, %47, %48, %49, %50, %51, %52 in 3 : vector<4x4x8x24xf32>, vector<4x4x8x24xf32>, vector<4x4x8x24xf32>, vector<4x4x8x24xf32>, vector<4x4x8x24xf32>, vector<4x4x8x24xf32>, vector<4x4x8x24xf32>, vector<4x4x8x24xf32>, vector<4x4x8x24xf32> -> vector<4x4x8x216xf32>
    %54 = vector.shape_cast %53 : vector<4x4x8x216xf32> to vector<128x216xf32>
    %c0_8 = arith.constant 0 : index
    %c0_9 = arith.constant 0 : index
    %55 = vector.load %arg4[%c0_8, %c0_9] : memref<216x64xf32, #tpu.memory_space<vmem>>, vector<216x64xf32>
    %cst_10 = arith.constant dense<0.000000e+00> : vector<128x64xf32>
    %56 = tpu.matmul %54, %55, %cst_10 {dimension_numbers = #tpu.dot_dimension_numbers<[1], [0], [0], [1], [0, 0, 1, 1], [], []>} : vector<128x216xf32>, vector<216x64xf32>, vector<128x64xf32> -> vector<128x64xf32>
    %c0_11 = arith.constant 0 : index
    %c0_12 = arith.constant 0 : index
    %57 = vector.load %arg5[%c0_11, %c0_12] : memref<1x64xf32, #tpu.memory_space<vmem>>, vector<1x64xf32>
    %58 = vector.broadcast %57 : vector<1x64xf32> to vector<128x64xf32>
    %59 = arith.addf %56, %58 : vector<128x64xf32>
    %60 = vector.extract_strided_slice %59 {offsets = [0, 0], sizes = [128, 16], strides = [1, 1]} : vector<128x64xf32> to vector<128x16xf32>
    %61 = vector.extract_strided_slice %59 {offsets = [0, 16], sizes = [128, 16], strides = [1, 1]} : vector<128x64xf32> to vector<128x16xf32>
    %62 = arith.maximumf %60, %61 : vector<128x16xf32>
    %63 = vector.extract_strided_slice %59 {offsets = [0, 32], sizes = [128, 16], strides = [1, 1]} : vector<128x64xf32> to vector<128x16xf32>
    %64 = vector.extract_strided_slice %59 {offsets = [0, 48], sizes = [128, 16], strides = [1, 1]} : vector<128x64xf32> to vector<128x16xf32>
    %65 = arith.maximumf %63, %64 : vector<128x16xf32>
    %66 = arith.maximumf %62, %65 : vector<128x16xf32>
    %cst_13 = arith.constant 0.000000e+00 : f32
    %67 = vector.broadcast %cst_13 : f32 to vector<128x16xf32>
    %68 = arith.maximumf %66, %67 : vector<128x16xf32>
    %69 = vector.shape_cast %68 : vector<128x16xf32> to vector<16x8x16xf32>
    %70 = vector.extract_strided_slice %69 {offsets = [0, 0, 0], sizes = [1, 8, 16], strides = [1, 1, 1]} : vector<16x8x16xf32> to vector<1x8x16xf32>
    %71 = vector.shape_cast %70 : vector<1x8x16xf32> to vector<8x16xf32>
    %72 = vector.extract_strided_slice %69 {offsets = [1, 0, 0], sizes = [1, 8, 16], strides = [1, 1, 1]} : vector<16x8x16xf32> to vector<1x8x16xf32>
    %73 = vector.shape_cast %72 : vector<1x8x16xf32> to vector<8x16xf32>
    %74 = vector.extract_strided_slice %69 {offsets = [2, 0, 0], sizes = [1, 8, 16], strides = [1, 1, 1]} : vector<16x8x16xf32> to vector<1x8x16xf32>
    %75 = vector.shape_cast %74 : vector<1x8x16xf32> to vector<8x16xf32>
    %76 = vector.extract_strided_slice %69 {offsets = [3, 0, 0], sizes = [1, 8, 16], strides = [1, 1, 1]} : vector<16x8x16xf32> to vector<1x8x16xf32>
    %77 = vector.shape_cast %76 : vector<1x8x16xf32> to vector<8x16xf32>
    %78 = vector.extract_strided_slice %69 {offsets = [4, 0, 0], sizes = [1, 8, 16], strides = [1, 1, 1]} : vector<16x8x16xf32> to vector<1x8x16xf32>
    %79 = vector.shape_cast %78 : vector<1x8x16xf32> to vector<8x16xf32>
    %80 = vector.extract_strided_slice %69 {offsets = [5, 0, 0], sizes = [1, 8, 16], strides = [1, 1, 1]} : vector<16x8x16xf32> to vector<1x8x16xf32>
    %81 = vector.shape_cast %80 : vector<1x8x16xf32> to vector<8x16xf32>
    %82 = vector.extract_strided_slice %69 {offsets = [6, 0, 0], sizes = [1, 8, 16], strides = [1, 1, 1]} : vector<16x8x16xf32> to vector<1x8x16xf32>
    %83 = vector.shape_cast %82 : vector<1x8x16xf32> to vector<8x16xf32>
    %84 = vector.extract_strided_slice %69 {offsets = [7, 0, 0], sizes = [1, 8, 16], strides = [1, 1, 1]} : vector<16x8x16xf32> to vector<1x8x16xf32>
    %85 = vector.shape_cast %84 : vector<1x8x16xf32> to vector<8x16xf32>
    %86 = vector.extract_strided_slice %69 {offsets = [8, 0, 0], sizes = [1, 8, 16], strides = [1, 1, 1]} : vector<16x8x16xf32> to vector<1x8x16xf32>
    %87 = vector.shape_cast %86 : vector<1x8x16xf32> to vector<8x16xf32>
    %88 = vector.extract_strided_slice %69 {offsets = [9, 0, 0], sizes = [1, 8, 16], strides = [1, 1, 1]} : vector<16x8x16xf32> to vector<1x8x16xf32>
    %89 = vector.shape_cast %88 : vector<1x8x16xf32> to vector<8x16xf32>
    %90 = vector.extract_strided_slice %69 {offsets = [10, 0, 0], sizes = [1, 8, 16], strides = [1, 1, 1]} : vector<16x8x16xf32> to vector<1x8x16xf32>
    %91 = vector.shape_cast %90 : vector<1x8x16xf32> to vector<8x16xf32>
    %92 = vector.extract_strided_slice %69 {offsets = [11, 0, 0], sizes = [1, 8, 16], strides = [1, 1, 1]} : vector<16x8x16xf32> to vector<1x8x16xf32>
    %93 = vector.shape_cast %92 : vector<1x8x16xf32> to vector<8x16xf32>
    %94 = vector.extract_strided_slice %69 {offsets = [12, 0, 0], sizes = [1, 8, 16], strides = [1, 1, 1]} : vector<16x8x16xf32> to vector<1x8x16xf32>
    %95 = vector.shape_cast %94 : vector<1x8x16xf32> to vector<8x16xf32>
    %96 = vector.extract_strided_slice %69 {offsets = [13, 0, 0], sizes = [1, 8, 16], strides = [1, 1, 1]} : vector<16x8x16xf32> to vector<1x8x16xf32>
    %97 = vector.shape_cast %96 : vector<1x8x16xf32> to vector<8x16xf32>
    %98 = vector.extract_strided_slice %69 {offsets = [14, 0, 0], sizes = [1, 8, 16], strides = [1, 1, 1]} : vector<16x8x16xf32> to vector<1x8x16xf32>
    %99 = vector.shape_cast %98 : vector<1x8x16xf32> to vector<8x16xf32>
    %100 = vector.extract_strided_slice %69 {offsets = [15, 0, 0], sizes = [1, 8, 16], strides = [1, 1, 1]} : vector<16x8x16xf32> to vector<1x8x16xf32>
    %101 = vector.shape_cast %100 : vector<1x8x16xf32> to vector<8x16xf32>
    %102 = tpu.concatenate %71, %73, %75, %77, %79, %81, %83, %85, %87, %89, %91, %93, %95, %97, %99, %101 in 1 : vector<8x16xf32>, vector<8x16xf32>, vector<8x16xf32>, vector<8x16xf32>, vector<8x16xf32>, vector<8x16xf32>, vector<8x16xf32>, vector<8x16xf32>, vector<8x16xf32>, vector<8x16xf32>, vector<8x16xf32>, vector<8x16xf32>, vector<8x16xf32>, vector<8x16xf32>, vector<8x16xf32>, vector<8x16xf32> -> vector<8x256xf32>
    %c0_14 = arith.constant 0 : index
    %c0_15 = arith.constant 0 : index
    %103 = vector.load %arg6[%c0_14, %c0_15] : memref<256x120xf32, #tpu.memory_space<vmem>>, vector<256x120xf32>
    %cst_16 = arith.constant dense<0.000000e+00> : vector<8x120xf32>
    %104 = tpu.matmul %102, %103, %cst_16 {dimension_numbers = #tpu.dot_dimension_numbers<[1], [0], [0], [1], [0, 0, 1, 1], [], []>} : vector<8x256xf32>, vector<256x120xf32>, vector<8x120xf32> -> vector<8x120xf32>
    %c0_17 = arith.constant 0 : index
    %c0_18 = arith.constant 0 : index
    %105 = vector.load %arg7[%c0_17, %c0_18] : memref<1x120xf32, #tpu.memory_space<vmem>>, vector<1x120xf32>
    %106 = vector.broadcast %105 : vector<1x120xf32> to vector<8x120xf32>
    %107 = arith.addf %104, %106 : vector<8x120xf32>
    %cst_19 = arith.constant 0.000000e+00 : f32
    %108 = vector.broadcast %cst_19 : f32 to vector<8x120xf32>
    %109 = arith.maximumf %107, %108 : vector<8x120xf32>
    %c0_20 = arith.constant 0 : index
    %c0_21 = arith.constant 0 : index
    %110 = vector.load %arg8[%c0_20, %c0_21] : memref<120x84xf32, #tpu.memory_space<vmem>>, vector<120x84xf32>
    %cst_22 = arith.constant dense<0.000000e+00> : vector<8x84xf32>
    %111 = tpu.matmul %109, %110, %cst_22 {dimension_numbers = #tpu.dot_dimension_numbers<[1], [0], [0], [1], [0, 0, 1, 1], [], []>} : vector<8x120xf32>, vector<120x84xf32>, vector<8x84xf32> -> vector<8x84xf32>
    %c0_23 = arith.constant 0 : index
    %c0_24 = arith.constant 0 : index
    %112 = vector.load %arg9[%c0_23, %c0_24] : memref<1x84xf32, #tpu.memory_space<vmem>>, vector<1x84xf32>
    %113 = vector.broadcast %112 : vector<1x84xf32> to vector<8x84xf32>
    %114 = arith.addf %111, %113 : vector<8x84xf32>
    %cst_25 = arith.constant 0.000000e+00 : f32
    %115 = vector.broadcast %cst_25 : f32 to vector<8x84xf32>
    %116 = arith.maximumf %114, %115 : vector<8x84xf32>
    %c0_26 = arith.constant 0 : index
    %c0_27 = arith.constant 0 : index
    %117 = vector.load %arg10[%c0_26, %c0_27] : memref<84x128xf32, #tpu.memory_space<vmem>>, vector<84x128xf32>
    %cst_28 = arith.constant dense<0.000000e+00> : vector<8x128xf32>
    %118 = tpu.matmul %116, %117, %cst_28 {dimension_numbers = #tpu.dot_dimension_numbers<[1], [0], [0], [1], [0, 0, 1, 1], [], []>} : vector<8x84xf32>, vector<84x128xf32>, vector<8x128xf32> -> vector<8x128xf32>
    %c0_29 = arith.constant 0 : index
    %c0_30 = arith.constant 0 : index
    %119 = vector.load %arg11[%c0_29, %c0_30] : memref<1x128xf32, #tpu.memory_space<vmem>>, vector<1x128xf32>
    %120 = vector.broadcast %119 : vector<1x128xf32> to vector<8x128xf32>
    %121 = arith.addf %118, %120 : vector<8x128xf32>
    %c0_31 = arith.constant 0 : index
    %c0_32 = arith.constant 0 : index
    %122 = vector.load %arg12[%c0_31, %c0_32] : memref<8x128xf32, #tpu.memory_space<vmem>>, vector<8x128xf32>
    tpu.vector_store %arg12[%c0_31, %c0_32], %121 {strides = array<i32>} : memref<8x128xf32, #tpu.memory_space<vmem>>, vector<8x128xf32>,
    return
  }
  func.func @transform_0(%arg0: i32) -> (i32, i32, i32, i32) {
    %c0_i32 = arith.constant 0 : i32
    %c0_i32_0 = arith.constant 0 : i32
    %c0_i32_1 = arith.constant 0 : i32
    %c0_i32_2 = arith.constant 0 : i32
    return %c0_i32, %c0_i32_0, %arg0, %c0_i32_1 : i32, i32, i32, i32
  }
  func.func @transform_1(%arg0: i32) -> (i32, i32) {
    %c0_i32 = arith.constant 0 : i32
    %c0_i32_0 = arith.constant 0 : i32
    %c0_i32_1 = arith.constant 0 : i32
    return %c0_i32, %c0_i32_0 : i32, i32
  }
  func.func @transform_2(%arg0: i32) -> (i32, i32) {
    %c0_i32 = arith.constant 0 : i32
    %c0_i32_0 = arith.constant 0 : i32
    %c0_i32_1 = arith.constant 0 : i32
    return %c0_i32, %c0_i32_0 : i32, i32
  }
  func.func @transform_3(%arg0: i32) -> (i32, i32) {
    %c0_i32 = arith.constant 0 : i32
    %c0_i32_0 = arith.constant 0 : i32
    %c0_i32_1 = arith.constant 0 : i32
    return %c0_i32, %c0_i32_0 : i32, i32
  }
  func.func @transform_4(%arg0: i32) -> (i32, i32) {
    %c0_i32 = arith.constant 0 : i32
    %c0_i32_0 = arith.constant 0 : i32
    %c0_i32_1 = arith.constant 0 : i32
    return %c0_i32, %c0_i32_0 : i32, i32
  }
  func.func @transform_5(%arg0: i32) -> (i32, i32) {
    %c0_i32 = arith.constant 0 : i32
    %c0_i32_0 = arith.constant 0 : i32
    %c0_i32_1 = arith.constant 0 : i32
    return %c0_i32, %c0_i32_0 : i32, i32
  }
  func.func @transform_6(%arg0: i32) -> (i32, i32) {
    %c0_i32 = arith.constant 0 : i32
    %c0_i32_0 = arith.constant 0 : i32
    %c0_i32_1 = arith.constant 0 : i32
    return %c0_i32, %c0_i32_0 : i32, i32
  }
  func.func @transform_7(%arg0: i32) -> (i32, i32) {
    %c0_i32 = arith.constant 0 : i32
    %c0_i32_0 = arith.constant 0 : i32
    %c0_i32_1 = arith.constant 0 : i32
    return %c0_i32, %c0_i32_0 : i32, i32
  }
  func.func @transform_8(%arg0: i32) -> (i32, i32) {
    %c0_i32 = arith.constant 0 : i32
    %c0_i32_0 = arith.constant 0 : i32
    %c0_i32_1 = arith.constant 0 : i32
    return %c0_i32, %c0_i32_0 : i32, i32
  }
  func.func @transform_9(%arg0: i32) -> (i32, i32) {
    %c0_i32 = arith.constant 0 : i32
    %c0_i32_0 = arith.constant 0 : i32
    %c0_i32_1 = arith.constant 0 : i32
    return %c0_i32, %c0_i32_0 : i32, i32
  }
  func.func @transform_10(%arg0: i32) -> (i32, i32) {
    %c0_i32 = arith.constant 0 : i32
    %c0_i32_0 = arith.constant 0 : i32
    %c0_i32_1 = arith.constant 0 : i32
    return %c0_i32, %c0_i32_0 : i32, i32
  }
  func.func @transform_11(%arg0: i32) -> (i32, i32) {
    %c0_i32 = arith.constant 0 : i32
    %c0_i32_0 = arith.constant 0 : i32
    return %arg0, %c0_i32 : i32, i32
  }
}

</mosaic_0001>

<llo_original>
// kernel: lenet_forward.1
$region0: #{lenet_forward.1}
  #allocation0 [shape = 'u32[]', space=smem, size = 0x4, offset = 0x4, fixed_abs, tag = 'smem constant byte address 0x4 - core index']
  #allocation1 [shape = 'u32[144,128]{1,0:T(1,128)}', space=vmem, size = 0x12000, scoped, tag = 'internal scratch']
  %s0 = inlined_call_operand.vmem [shape: f32[7,7,8,16], index: 0, kind: input, shape index: {}]
  %s1 = inlined_call_operand.vmem [shape: f32[64,96], index: 1, kind: input, shape index: {}]
  %s2 = inlined_call_operand.vmem [shape: f32[1,96], index: 2, kind: input, shape index: {}]
  %s3 = inlined_call_operand.vmem [shape: f32[216,64], index: 3, kind: input, shape index: {}]
  %s4 = inlined_call_operand.vmem [shape: f32[1,64], index: 4, kind: input, shape index: {}]
  %s5 = inlined_call_operand.vmem [shape: f32[256,120], index: 5, kind: input, shape index: {}]
  %s6 = inlined_call_operand.vmem [shape: f32[1,120], index: 6, kind: input, shape index: {}]
  %s7 = inlined_call_operand.vmem [shape: f32[120,84], index: 7, kind: input, shape index: {}]
  %s8 = inlined_call_operand.vmem [shape: f32[1,84], index: 8, kind: input, shape index: {}]
  %s9 = inlined_call_operand.vmem [shape: f32[84,128], index: 9, kind: input, shape index: {}]
  %s10 = inlined_call_operand.vmem [shape: f32[1,128], index: 10, kind: input, shape index: {}]
  %s11 = inlined_call_operand.vmem [shape: f32[8,128], index: 11, kind: output, shape index: {}]
  %s12 = sld [smem:[#allocation0]]
  $region54: #{lenet_forward.1} parent=0
    _
  %s14 = ssub.s32 1, %s12
  %s15 = scalar_select 0, %s14, %s12
  // Predicated region
  $region2: #{lenet_forward.1} parent=0 // pred_check
    _
  $region3: #{lenet_forward.1} parent=0 // pred_check_branch
    %17 = sbr.rel (0) target = $region5
  $region4: #{lenet_forward.1} parent=0 // pred_region
    _
  $region5: #{lenet_forward.1} parent=0 // pred_fallthru
    _
  // Predicated region
  $region6: #{lenet_forward.1} parent=0 // pred_check
    _
  $region7: #{lenet_forward.1} parent=0 // pred_check_branch
    %19 = sbr.rel (0) target = $region9
  $region8: #{lenet_forward.1} parent=0 // pred_region
    _
  $region9: #{lenet_forward.1} parent=0 // pred_fallthru
    _
  // Predicated region
  $region10: #{lenet_forward.1} parent=0 // pred_check
    _
  $region11: #{lenet_forward.1} parent=0 // pred_check_branch
    %21 = sbr.rel (0) target = $region13
  $region12: #{lenet_forward.1} parent=0 // pred_region
    _
  $region13: #{lenet_forward.1} parent=0 // pred_fallthru
    _
  // Predicated region
  $region14: #{lenet_forward.1} parent=0 // pred_check
    _
  $region15: #{lenet_forward.1} parent=0 // pred_check_branch
    %23 = sbr.rel (0) target = $region17
  $region16: #{lenet_forward.1} parent=0 // pred_region
    _
  $region17: #{lenet_forward.1} parent=0 // pred_fallthru
    _
  // Predicated region
  $region18: #{lenet_forward.1} parent=0 // pred_check
    _
  $region19: #{lenet_forward.1} parent=0 // pred_check_branch
    %25 = sbr.rel (0) target = $region21
  $region20: #{lenet_forward.1} parent=0 // pred_region
    _
  $region21: #{lenet_forward.1} parent=0 // pred_fallthru
    _
  // Predicated region
  $region22: #{lenet_forward.1} parent=0 // pred_check
    _
  $region23: #{lenet_forward.1} parent=0 // pred_check_branch
    %27 = sbr.rel (0) target = $region25
  $region24: #{lenet_forward.1} parent=0 // pred_region
    _
  $region25: #{lenet_forward.1} parent=0 // pred_fallthru
    _
  // Predicated region
  $region26: #{lenet_forward.1} parent=0 // pred_check
    _
  $region27: #{lenet_forward.1} parent=0 // pred_check_branch
    %29 = sbr.rel (0) target = $region29
  $region28: #{lenet_forward.1} parent=0 // pred_region
    _
  $region29: #{lenet_forward.1} parent=0 // pred_fallthru
    _
  // Predicated region
  $region30: #{lenet_forward.1} parent=0 // pred_check
    _
  $region31: #{lenet_forward.1} parent=0 // pred_check_branch
    %31 = sbr.rel (0) target = $region33
  $region32: #{lenet_forward.1} parent=0 // pred_region
    _
  $region33: #{lenet_forward.1} parent=0 // pred_fallthru
    _
  // Predicated region
  $region34: #{lenet_forward.1} parent=0 // pred_check
    _
  $region35: #{lenet_forward.1} parent=0 // pred_check_branch
    %33 = sbr.rel (0) target = $region37
  $region36: #{lenet_forward.1} parent=0 // pred_region
    _
  $region37: #{lenet_forward.1} parent=0 // pred_fallthru
    _
  // Predicated region
  $region38: #{lenet_forward.1} parent=0 // pred_check
    _
  $region39: #{lenet_forward.1} parent=0 // pred_check_branch
    %35 = sbr.rel (0) target = $region41
  $region40: #{lenet_forward.1} parent=0 // pred_region
    _
  $region41: #{lenet_forward.1} parent=0 // pred_fallthru
    _
  // Predicated region
  $region42: #{lenet_forward.1} parent=0 // pred_check
    _
  $region43: #{lenet_forward.1} parent=0 // pred_check_branch
    %37 = sbr.rel (0) target = $region45
  $region44: #{lenet_forward.1} parent=0 // pred_region
    _
  $region45: #{lenet_forward.1} parent=0 // pred_fallthru
    _
  %v38 = vld [vmem:[%s0] sm:$0xff]
  %v39 = vld [vmem:[%s0 + $0x8] sm:$0xff]
  %v40 = vld [vmem:[%s0 + $0x10] sm:$0xff]
  %v41 = vld [vmem:[%s0 + $0x18] sm:$0xff]
  %v42 = vld [vmem:[%s0 + $0x20] sm:$0xff]
  %v43 = vld [vmem:[%s0 + $0x28] sm:$0xff]
  %v44 = vld [vmem:[%s0 + $0x30] sm:$0xff]
  %v45 = vld [vmem:[%s0 + $0x38] sm:$0xff]
  %v46 = vld [vmem:[%s0 + $0x40] sm:$0xff]
  %v47 = vld [vmem:[%s0 + $0x48] sm:$0xff]
  %v48 = vld [vmem:[%s0 + $0x50] sm:$0xff]
  %v49 = vld [vmem:[%s0 + $0x58] sm:$0xff]
  %v50 = vld [vmem:[%s0 + $0x60] sm:$0xff]
  %v51 = vld [vmem:[%s0 + $0x68] sm:$0xff]
  %v52 = vld [vmem:[%s0 + $0x70] sm:$0xff]
  %v53 = vld [vmem:[%s0 + $0x78] sm:$0xff]
  %v54 = vld [vmem:[%s0 + $0x80] sm:$0xff]
  %v55 = vld [vmem:[%s0 + $0x88] sm:$0xff]
  %v56 = vld [vmem:[%s0 + $0x90] sm:$0xff]
  %v57 = vld [vmem:[%s0 + $0x98] sm:$0xff]
  %v58 = vld [vmem:[%s0 + $0xa0] sm:$0xff]
  %v59 = vld [vmem:[%s0 + $0xa8] sm:$0xff]
  %v60 = vld [vmem:[%s0 + $0xb0] sm:$0xff]
  %v61 = vld [vmem:[%s0 + $0xb8] sm:$0xff]
  %v62 = vld [vmem:[%s0 + $0xc0] sm:$0xff]
  %v63 = vld [vmem:[%s0 + $0xc8] sm:$0xff]
  %v64 = vld [vmem:[%s0 + $0xd0] sm:$0xff]
  %v65 = vld [vmem:[%s0 + $0xd8] sm:$0xff]
  %v66 = vld [vmem:[%s0 + $0xe0] sm:$0xff]
  %v67 = vld [vmem:[%s0 + $0xe8] sm:$0xff]
  %v68 = vld [vmem:[%s0 + $0xf0] sm:$0xff]
  %v69 = vld [vmem:[%s0 + $0xf8] sm:$0xff]
  %v70 = vld [vmem:[%s0 + $0x100] sm:$0xff]
  %v71 = vld [vmem:[%s0 + $0x108] sm:$0xff]
  %v72 = vld [vmem:[%s0 + $0x110] sm:$0xff]
  %v73 = vld [vmem:[%s0 + $0x118] sm:$0xff]
  %v74 = vld [vmem:[%s0 + $0x120] sm:$0xff]
  %v75 = vld [vmem:[%s0 + $0x128] sm:$0xff]
  %v76 = vld [vmem:[%s0 + $0x130] sm:$0xff]
  %v77 = vld [vmem:[%s0 + $0x138] sm:$0xff]
  %v78 = vld [vmem:[%s0 + $0x140] sm:$0xff]
  %v79 = vld [vmem:[%s0 + $0x148] sm:$0xff]
  %v80 = vld [vmem:[%s0 + $0x150] sm:$0xff]
  %v81 = vld [vmem:[%s0 + $0x158] sm:$0xff]
  %v82 = vld [vmem:[%s0 + $0x160] sm:$0xff]
  %v83 = vld [vmem:[%s0 + $0x168] sm:$0xff]
  %v84 = vld [vmem:[%s0 + $0x170] sm:$0xff]
  %v85 = vld [vmem:[%s0 + $0x178] sm:$0xff]
  %v86 = vld [vmem:[%s0 + $0x180] sm:$0xff]
  %123 = vrot.lane.b32.xlu0 %v39, 16
  %v124 = vpop.permute.xlu0 %123
  %125 = vrot.lane.b32.xlu0 %v40, 16
  %v126 = vpop.permute.xlu0 %125
  %127 = vrot.lane.b32.xlu0 %v41, 16
  %v128 = vpop.permute.xlu0 %127
  %129 = vrot.lane.b32.xlu0 %v42, 16
  %v130 = vpop.permute.xlu0 %129
  %131 = vrot.lane.b32.xlu0 %v43, 16
  %v132 = vpop.permute.xlu0 %131
  %133 = vrot.lane.b32.xlu0 %v44, 16
  %v134 = vpop.permute.xlu0 %133
  %135 = vrot.lane.b32.xlu0 %v46, 16
  %v136 = vpop.permute.xlu0 %135
  %137 = vrot.lane.b32.xlu0 %v47, 16
  %v138 = vpop.permute.xlu0 %137
  %139 = vrot.lane.b32.xlu0 %v48, 16
  %v140 = vpop.permute.xlu0 %139
  %141 = vrot.lane.b32.xlu0 %v49, 16
  %v142 = vpop.permute.xlu0 %141
  %143 = vrot.lane.b32.xlu0 %v50, 16
  %v144 = vpop.permute.xlu0 %143
  %145 = vrot.lane.b32.xlu0 %v51, 16
  %v146 = vpop.permute.xlu0 %145
  %147 = vrot.lane.b32.xlu0 %v53, 16
  %v148 = vpop.permute.xlu0 %147
  %149 = vrot.lane.b32.xlu0 %v54, 16
  %v150 = vpop.permute.xlu0 %149
  %151 = vrot.lane.b32.xlu0 %v55, 16
  %v152 = vpop.permute.xlu0 %151
  %153 = vrot.lane.b32.xlu0 %v56, 16
  %v154 = vpop.permute.xlu0 %153
  %155 = vrot.lane.b32.xlu0 %v57, 16
  %v156 = vpop.permute.xlu0 %155
  %157 = vrot.lane.b32.xlu0 %v58, 16
  %v158 = vpop.permute.xlu0 %157
  %159 = vrot.lane.b32.xlu0 %v60, 16
  %v160 = vpop.permute.xlu0 %159
  %161 = vrot.lane.b32.xlu0 %v61, 16
  %v162 = vpop.permute.xlu0 %161
  %163 = vrot.lane.b32.xlu0 %v62, 16
  %v164 = vpop.permute.xlu0 %163
  %165 = vrot.lane.b32.xlu0 %v63, 16
  %v166 = vpop.permute.xlu0 %165
  %167 = vrot.lane.b32.xlu0 %v64, 16
  %v168 = vpop.permute.xlu0 %167
  %169 = vrot.lane.b32.xlu0 %v65, 16
  %v170 = vpop.permute.xlu0 %169
  %171 = vrot.lane.b32.xlu0 %v67, 16
  %v172 = vpop.permute.xlu0 %171
  %173 = vrot.lane.b32.xlu0 %v68, 16
  %v174 = vpop.permute.xlu0 %173
  %175 = vrot.lane.b32.xlu0 %v69, 16
  %v176 = vpop.permute.xlu0 %175
  %177 = vrot.lane.b32.xlu0 %v70, 16
  %v178 = vpop.permute.xlu0 %177
  %179 = vrot.lane.b32.xlu0 %v71, 16
  %v180 = vpop.permute.xlu0 %179
  %181 = vrot.lane.b32.xlu0 %v72, 16
  %v182 = vpop.permute.xlu0 %181
  %183 = vrot.lane.b32.xlu0 %v74, 16
  %v184 = vpop.permute.xlu0 %183
  %185 = vrot.lane.b32.xlu0 %v75, 16
  %v186 = vpop.permute.xlu0 %185
  %187 = vrot.lane.b32.xlu0 %v76, 16
  %v188 = vpop.permute.xlu0 %187
  %189 = vrot.lane.b32.xlu0 %v77, 16
  %v190 = vpop.permute.xlu0 %189
  %191 = vrot.lane.b32.xlu0 %v78, 16
  %v192 = vpop.permute.xlu0 %191
  %193 = vrot.lane.b32.xlu0 %v79, 16
  %v194 = vpop.permute.xlu0 %193
  %242 = vrot.lane.b32.xlu0 %v45, 32
  %v243 = vpop.permute.xlu0 %242
  %244 = vrot.lane.b32.xlu0 %v46, 32
  %v245 = vpop.permute.xlu0 %244
  %246 = vrot.lane.b32.xlu0 %v47, 32
  %v247 = vpop.permute.xlu0 %246
  %248 = vrot.lane.b32.xlu0 %v48, 32
  %v249 = vpop.permute.xlu0 %248
  %250 = vrot.lane.b32.xlu0 %v49, 32
  %v251 = vpop.permute.xlu0 %250
  %252 = vrot.lane.b32.xlu0 %v50, 32
  %v253 = vpop.permute.xlu0 %252
  %254 = vrot.lane.b32.xlu0 %v52, 32
  %v255 = vpop.permute.xlu0 %254
  %256 = vrot.lane.b32.xlu0 %v53, 32
  %v257 = vpop.permute.xlu0 %256
  %258 = vrot.lane.b32.xlu0 %v54, 32
  %v259 = vpop.permute.xlu0 %258
  %260 = vrot.lane.b32.xlu0 %v55, 32
  %v261 = vpop.permute.xlu0 %260
  %262 = vrot.lane.b32.xlu0 %v56, 32
  %v263 = vpop.permute.xlu0 %262
  %264 = vrot.lane.b32.xlu0 %v57, 32
  %v265 = vpop.permute.xlu0 %264
  %266 = vrot.lane.b32.xlu0 %v59, 32
  %v267 = vpop.permute.xlu0 %266
  %268 = vrot.lane.b32.xlu0 %v60, 32
  %v269 = vpop.permute.xlu0 %268
  %270 = vrot.lane.b32.xlu0 %v61, 32
  %v271 = vpop.permute.xlu0 %270
  %272 = vrot.lane.b32.xlu0 %v62, 32
  %v273 = vpop.permute.xlu0 %272
  %274 = vrot.lane.b32.xlu0 %v63, 32
  %v275 = vpop.permute.xlu0 %274
  %276 = vrot.lane.b32.xlu0 %v64, 32
  %v277 = vpop.permute.xlu0 %276
  %278 = vrot.lane.b32.xlu0 %v66, 32
  %v279 = vpop.permute.xlu0 %278
  %280 = vrot.lane.b32.xlu0 %v67, 32
  %v281 = vpop.permute.xlu0 %280
  %282 = vrot.lane.b32.xlu0 %v68, 32
  %v283 = vpop.permute.xlu0 %282
  %284 = vrot.lane.b32.xlu0 %v69, 32
  %v285 = vpop.permute.xlu0 %284
  %286 = vrot.lane.b32.xlu0 %v70, 32
  %v287 = vpop.permute.xlu0 %286
  %288 = vrot.lane.b32.xlu0 %v71, 32
  %v289 = vpop.permute.xlu0 %288
  %290 = vrot.lane.b32.xlu0 %v73, 32
  %v291 = vpop.permute.xlu0 %290
  %292 = vrot.lane.b32.xlu0 %v74, 32
  %v293 = vpop.permute.xlu0 %292
  %294 = vrot.lane.b32.xlu0 %v75, 32
  %v295 = vpop.permute.xlu0 %294
  %296 = vrot.lane.b32.xlu0 %v76, 32
  %v297 = vpop.permute.xlu0 %296
  %298 = vrot.lane.b32.xlu0 %v77, 32
  %v299 = vpop.permute.xlu0 %298
  %300 = vrot.lane.b32.xlu0 %v78, 32
  %v301 = vpop.permute.xlu0 %300
  %302 = vrot.lane.b32.xlu0 %v80, 32
  %v303 = vpop.permute.xlu0 %302
  %304 = vrot.lane.b32.xlu0 %v81, 32
  %v305 = vpop.permute.xlu0 %304
  %306 = vrot.lane.b32.xlu0 %v82, 32
  %v307 = vpop.permute.xlu0 %306
  %308 = vrot.lane.b32.xlu0 %v83, 32
  %v309 = vpop.permute.xlu0 %308
  %310 = vrot.lane.b32.xlu0 %v84, 32
  %v311 = vpop.permute.xlu0 %310
  %312 = vrot.lane.b32.xlu0 %v85, 32
  %v313 = vpop.permute.xlu0 %312
  %351 = vrot.lane.b32.xlu0 %v46, 48
  %v352 = vpop.permute.xlu0 %351
  %353 = vrot.lane.b32.xlu0 %v47, 48
  %v354 = vpop.permute.xlu0 %353
  %355 = vrot.lane.b32.xlu0 %v48, 48
  %v356 = vpop.permute.xlu0 %355
  %357 = vrot.lane.b32.xlu0 %v49, 48
  %v358 = vpop.permute.xlu0 %357
  %359 = vrot.lane.b32.xlu0 %v50, 48
  %v360 = vpop.permute.xlu0 %359
  %361 = vrot.lane.b32.xlu0 %v51, 48
  %v362 = vpop.permute.xlu0 %361
  %363 = vrot.lane.b32.xlu0 %v53, 48
  %v364 = vpop.permute.xlu0 %363
  %365 = vrot.lane.b32.xlu0 %v54, 48
  %v366 = vpop.permute.xlu0 %365
  %367 = vrot.lane.b32.xlu0 %v55, 48
  %v368 = vpop.permute.xlu0 %367
  %369 = vrot.lane.b32.xlu0 %v56, 48
  %v370 = vpop.permute.xlu0 %369
  %371 = vrot.lane.b32.xlu0 %v57, 48
  %v372 = vpop.permute.xlu0 %371
  %373 = vrot.lane.b32.xlu0 %v58, 48
  %v374 = vpop.permute.xlu0 %373
  %375 = vrot.lane.b32.xlu0 %v60, 48
  %v376 = vpop.permute.xlu0 %375
  %377 = vrot.lane.b32.xlu0 %v61, 48
  %v378 = vpop.permute.xlu0 %377
  %379 = vrot.lane.b32.xlu0 %v62, 48
  %v380 = vpop.permute.xlu0 %379
  %381 = vrot.lane.b32.xlu0 %v63, 48
  %v382 = vpop.permute.xlu0 %381
  %383 = vrot.lane.b32.xlu0 %v64, 48
  %v384 = vpop.permute.xlu0 %383
  %385 = vrot.lane.b32.xlu0 %v65, 48
  %v386 = vpop.permute.xlu0 %385
  %387 = vrot.lane.b32.xlu0 %v67, 48
  %v388 = vpop.permute.xlu0 %387
  %389 = vrot.lane.b32.xlu0 %v68, 48
  %v390 = vpop.permute.xlu0 %389
  %391 = vrot.lane.b32.xlu0 %v69, 48
  %v392 = vpop.permute.xlu0 %391
  %393 = vrot.lane.b32.xlu0 %v70, 48
  %v394 = vpop.permute.xlu0 %393
  %395 = vrot.lane.b32.xlu0 %v71, 48
  %v396 = vpop.permute.xlu0 %395
  %397 = vrot.lane.b32.xlu0 %v72, 48
  %v398 = vpop.permute.xlu0 %397
  %399 = vrot.lane.b32.xlu0 %v74, 48
  %v400 = vpop.permute.xlu0 %399
  %401 = vrot.lane.b32.xlu0 %v75, 48
  %v402 = vpop.permute.xlu0 %401
  %403 = vrot.lane.b32.xlu0 %v76, 48
  %v404 = vpop.permute.xlu0 %403
  %405 = vrot.lane.b32.xlu0 %v77, 48
  %v406 = vpop.permute.xlu0 %405
  %407 = vrot.lane.b32.xlu0 %v78, 48
  %v408 = vpop.permute.xlu0 %407
  %409 = vrot.lane.b32.xlu0 %v79, 48
  %v410 = vpop.permute.xlu0 %409
  %411 = vrot.lane.b32.xlu0 %v81, 48
  %v412 = vpop.permute.xlu0 %411
  %413 = vrot.lane.b32.xlu0 %v82, 48
  %v414 = vpop.permute.xlu0 %413
  %415 = vrot.lane.b32.xlu0 %v83, 48
  %v416 = vpop.permute.xlu0 %415
  %417 = vrot.lane.b32.xlu0 %v84, 48
  %v418 = vpop.permute.xlu0 %417
  %419 = vrot.lane.b32.xlu0 %v85, 48
  %v420 = vpop.permute.xlu0 %419
  %421 = vrot.lane.b32.xlu0 %v86, 48
  %v422 = vpop.permute.xlu0 %421
  %vm459 = vcmask 130048
  %v460 = vsel %vm459, %v38, %v124
  %v461 = vsel %vm459, %v39, %v126
  %v462 = vsel %vm459, %v40, %v128
  %v463 = vsel %vm459, %v41, %v130
  %v464 = vsel %vm459, %v42, %v132
  %v465 = vsel %vm459, %v43, %v134
  %v466 = vsel %vm459, %v45, %v136
  %v467 = vsel %vm459, %v46, %v138
  %v468 = vsel %vm459, %v47, %v140
  %v469 = vsel %vm459, %v48, %v142
  %v470 = vsel %vm459, %v49, %v144
  %v471 = vsel %vm459, %v50, %v146
  %v472 = vsel %vm459, %v52, %v148
  %v473 = vsel %vm459, %v53, %v150
  %v474 = vsel %vm459, %v54, %v152
  %v475 = vsel %vm459, %v55, %v154
  %v476 = vsel %vm459, %v56, %v156
  %v477 = vsel %vm459, %v57, %v158
  %v478 = vsel %vm459, %v59, %v160
  %v479 = vsel %vm459, %v60, %v162
  %v480 = vsel %vm459, %v61, %v164
  %v481 = vsel %vm459, %v62, %v166
  %v482 = vsel %vm459, %v63, %v168
  %v483 = vsel %vm459, %v64, %v170
  %v484 = vsel %vm459, %v66, %v172
  %v485 = vsel %vm459, %v67, %v174
  %v486 = vsel %vm459, %v68, %v176
  %v487 = vsel %vm459, %v69, %v178
  %v488 = vsel %vm459, %v70, %v180
  %v489 = vsel %vm459, %v71, %v182
  %v490 = vsel %vm459, %v73, %v184
  %v491 = vsel %vm459, %v74, %v186
  %v492 = vsel %vm459, %v75, %v188
  %v493 = vsel %vm459, %v76, %v190
  %v494 = vsel %vm459, %v77, %v192
  %v495 = vsel %vm459, %v78, %v194
  %vm496 = vcmask 261120
  %v497 = vsel %vm496, %v460, %v243
  %v498 = vsel %vm496, %v461, %v245
  %v499 = vsel %vm496, %v462, %v247
  %v500 = vsel %vm496, %v463, %v249
  %v501 = vsel %vm496, %v464, %v251
  %v502 = vsel %vm496, %v465, %v253
  %v503 = vsel %vm496, %v466, %v255
  %v504 = vsel %vm496, %v467, %v257
  %v505 = vsel %vm496, %v468, %v259
  %v506 = vsel %vm496, %v469, %v261
  %v507 = vsel %vm496, %v470, %v263
  %v508 = vsel %vm496, %v471, %v265
  %v509 = vsel %vm496, %v472, %v267
  %v510 = vsel %vm496, %v473, %v269
  %v511 = vsel %vm496, %v474, %v271
  %v512 = vsel %vm496, %v475, %v273
  %v513 = vsel %vm496, %v476, %v275
  %v514 = vsel %vm496, %v477, %v277
  %v515 = vsel %vm496, %v478, %v279
  %v516 = vsel %vm496, %v479, %v281
  %v517 = vsel %vm496, %v480, %v283
  %v518 = vsel %vm496, %v481, %v285
  %v519 = vsel %vm496, %v482, %v287
  %v520 = vsel %vm496, %v483, %v289
  %v521 = vsel %vm496, %v484, %v291
  %v522 = vsel %vm496, %v485, %v293
  %v523 = vsel %vm496, %v486, %v295
  %v524 = vsel %vm496, %v487, %v297
  %v525 = vsel %vm496, %v488, %v299
  %v526 = vsel %vm496, %v489, %v301
  %v527 = vsel %vm496, %v490, %v303
  %v528 = vsel %vm496, %v491, %v305
  %v529 = vsel %vm496, %v492, %v307
  %v530 = vsel %vm496, %v493, %v309
  %v531 = vsel %vm496, %v494, %v311
  %v532 = vsel %vm496, %v495, %v313
  %vm533 = vcmask 392192
  %v534 = vsel %vm533, %v497, %v352
  %v535 = vsel %vm533, %v498, %v354
  %v536 = vsel %vm533, %v499, %v356
  %v537 = vsel %vm533, %v500, %v358
  %v538 = vsel %vm533, %v501, %v360
  %v539 = vsel %vm533, %v502, %v362
  %v540 = vsel %vm533, %v503, %v364
  %v541 = vsel %vm533, %v504, %v366
  %v542 = vsel %vm533, %v505, %v368
  %v543 = vsel %vm533, %v506, %v370
  %v544 = vsel %vm533, %v507, %v372
  %v545 = vsel %vm533, %v508, %v374
  %v546 = vsel %vm533, %v509, %v376
  %v547 = vsel %vm533, %v510, %v378
  %v548 = vsel %vm533, %v511, %v380
  %v549 = vsel %vm533, %v512, %v382
  %v550 = vsel %vm533, %v513, %v384
  %v551 = vsel %vm533, %v514, %v386
  %v552 = vsel %vm533, %v515, %v388
  %v553 = vsel %vm533, %v516, %v390
  %v554 = vsel %vm533, %v517, %v392
  %v555 = vsel %vm533, %v518, %v394
  %v556 = vsel %vm533, %v519, %v396
  %v557 = vsel %vm533, %v520, %v398
  %v558 = vsel %vm533, %v521, %v400
  %v559 = vsel %vm533, %v522, %v402
  %v560 = vsel %vm533, %v523, %v404
  %v561 = vsel %vm533, %v524, %v406
  %v562 = vsel %vm533, %v525, %v408
  %v563 = vsel %vm533, %v526, %v410
  %v564 = vsel %vm533, %v527, %v412
  %v565 = vsel %vm533, %v528, %v414
  %v566 = vsel %vm533, %v529, %v416
  %v567 = vsel %vm533, %v530, %v418
  %v568 = vsel %vm533, %v531, %v420
  %v569 = vsel %vm533, %v532, %v422
  %v570 = vld [vmem:[%s1] sm:$0xff]
  %v571 = vld [vmem:[%s1 + $0x8] sm:$0xff]
  %v572 = vld [vmem:[%s1 + $0x10] sm:$0xff]
  %v573 = vld [vmem:[%s1 + $0x18] sm:$0xff]
  %v574 = vld [vmem:[%s1 + $0x20] sm:$0xff]
  %v575 = vld [vmem:[%s1 + $0x28] sm:$0xff]
  %v576 = vld [vmem:[%s1 + $0x30] sm:$0xff]
  %v577 = vld [vmem:[%s1 + $0x38] sm:$0xff]
  %v578 = vld [vmem:[%s2] sm:$0x1]
  %v580 = vlaneseq
  %v581 = vshrl.u32 %v580, 7
  %v582 = vsub.s32 0, %v581
  %v583 = vrot.slane %v578, %v582
  %vm585 = vcmask 523264
  %v587 = vsel %vm585, %v534, 0
  %v590 = vsel %vm585, %v535, 0
  %v593 = vsel %vm585, %v536, 0
  %v596 = vsel %vm585, %v537, 0
  %v599 = vsel %vm585, %v538, 0
  %v602 = vsel %vm585, %v539, 0
  %v605 = vsel %vm585, %v540, 0
  %v608 = vsel %vm585, %v541, 0
  %v611 = vsel %vm585, %v542, 0
  %v614 = vsel %vm585, %v543, 0
  %v617 = vsel %vm585, %v544, 0
  %v620 = vsel %vm585, %v545, 0
  %v623 = vsel %vm585, %v546, 0
  %v626 = vsel %vm585, %v547, 0
  %v629 = vsel %vm585, %v548, 0
  %v632 = vsel %vm585, %v549, 0
  %v635 = vsel %vm585, %v550, 0
  %v638 = vsel %vm585, %v551, 0
  %v641 = vsel %vm585, %v552, 0
  %v644 = vsel %vm585, %v553, 0
  %v647 = vsel %vm585, %v554, 0
  %v650 = vsel %vm585, %v555, 0
  %v653 = vsel %vm585, %v556, 0
  %v656 = vsel %vm585, %v557, 0
  %v659 = vsel %vm585, %v558, 0
  %v662 = vsel %vm585, %v559, 0
  %v665 = vsel %vm585, %v560, 0
  %v668 = vsel %vm585, %v561, 0
  %v671 = vsel %vm585, %v562, 0
  %v674 = vsel %vm585, %v563, 0
  %v677 = vsel %vm585, %v564, 0
  %v680 = vsel %vm585, %v565, 0
  %v683 = vsel %vm585, %v566, 0
  %v686 = vsel %vm585, %v567, 0
  %v689 = vsel %vm585, %v568, 0
  %v692 = vsel %vm585, %v569, 0
  %694 = vmatprep.subr.mxu0 0.0
  %695 = vmatpush1.msra.mxu0 0.0
  %696 = vmatprep.subr.mxu0 0.0
  %697 = vmatpush1.msra.mxu0 0.0
  %698 = vmatprep.subr.mxu0 0.0
  %699 = vmatpush1.msra.mxu0 0.0
  %700 = vmatprep.subr.mxu0 0.0
  %701 = vmatpush1.msra.mxu0 0.0
  %702 = vmatprep.subr.mxu0 0.0
  %703 = vmatpush1.msra.mxu0 0.0
  %704 = vmatprep.subr.mxu0 0.0
  %705 = vmatpush1.msra.mxu0 0.0
  %706 = vmatprep.subr.mxu0 0.0
  %707 = vmatpush1.msra.mxu0 0.0
  %708 = vmatprep.subr.mxu0 0.0
  %709 = vmatpush1.msra.mxu0 0.0
  %710 = vmatprep.subr.mxu0 0.0
  %711 = vmatpush1.msra.mxu0 %v577
  %712 = vmatprep.subr.mxu0 0.0
  %713 = vmatpush1.msra.mxu0 %v576
  %714 = vmatprep.subr.mxu0 0.0
  %715 = vmatpush1.msra.mxu0 %v575
  %716 = vmatprep.subr.mxu0 0.0
  %717 = vmatpush1.msra.mxu0 %v574
  %718 = vmatprep.subr.mxu0 0.0
  %719 = vmatpush1.msra.mxu0 %v573
  %720 = vmatprep.subr.mxu0 0.0
  %721 = vmatpush1.msra.mxu0 %v572
  %722 = vmatprep.subr.mxu0 0.0
  %723 = vmatpush1.msra.mxu0 %v571
  %724 = vmatprep.subr.mxu0 0.0
  %725 = vmatpush1.msra.mxu0 %v570
  %726 = vmatprep.subr.mxu0 0.0
  %727 = vmatpush2.msra.mxu0 0.0
  %728 = vmatprep.subr.mxu0 0.0
  %729 = vmatpush2.msra.mxu0 0.0
  %730 = vmatprep.subr.mxu0 0.0
  %731 = vmatpush2.msra.mxu0 0.0
  %732 = vmatprep.subr.mxu0 0.0
  %733 = vmatpush2.msra.mxu0 0.0
  %734 = vmatprep.subr.mxu0 0.0
  %735 = vmatpush2.msra.mxu0 0.0
  %736 = vmatprep.subr.mxu0 0.0
  %737 = vmatpush2.msra.mxu0 0.0
  %738 = vmatprep.subr.mxu0 0.0
  %739 = vmatpush2.msra.mxu0 0.0
  %740 = vmatprep.subr.mxu0 0.0
  %741 = vmatpush2.msra.mxu0 0.0
  %742 = vmatprep.subr.mxu0 0.0
  %743 = vmatpush2.msra.mxu0 0.0
  %744 = vmatprep.subr.mxu0 0.0
  %745 = vmatpush2.msra.mxu0 0.0
  %746 = vmatprep.subr.mxu0 0.0
  %747 = vmatpush2.msra.mxu0 0.0
  %748 = vmatprep.subr.mxu0 0.0
  %749 = vmatpush2.msra.mxu0 0.0
  %750 = vmatprep.subr.mxu0 0.0
  %751 = vmatpush2.msra.mxu0 0.0
  %752 = vmatprep.subr.mxu0 0.0
  %753 = vmatpush2.msra.mxu0 0.0
  %754 = vmatprep.subr.mxu0 0.0
  %755 = vmatpush2.msra.mxu0 0.0
  %756 = vmatprep.subr.mxu0 0.0
  %757 = vmatpush2.msra.mxu0 0.0
  %758 = vmatprep.mubr.f32.mxu0 0.0
  %759 = vmatmul.mubr.f32.gmra.mxu0 %v587
  %v760 = vpop.f32.mrf.mxu0
  %v761 = vadd.f32 %v583, %v760
  %v762 = vpop.f32.mrf.mxu0
  %763 = vmatprep.mubr.f32.mxu0 0.0
  %764 = vmatmul.mubr.f32.gmra.mxu0 %v590
  %v765 = vpop.f32.mrf.mxu0
  %v766 = vadd.f32 %v583, %v765
  %v767 = vpop.f32.mrf.mxu0
  %768 = vmatprep.mubr.f32.mxu0 0.0
  %769 = vmatmul.mubr.f32.gmra.mxu0 %v593
  %v770 = vpop.f32.mrf.mxu0
  %v771 = vadd.f32 %v583, %v770
  %v772 = vpop.f32.mrf.mxu0
  %773 = vmatprep.mubr.f32.mxu0 0.0
  %774 = vmatmul.mubr.f32.gmra.mxu0 %v596
  %v775 = vpop.f32.mrf.mxu0
  %v776 = vadd.f32 %v583, %v775
  %v777 = vpop.f32.mrf.mxu0
  %778 = vmatprep.mubr.f32.mxu0 0.0
  %779 = vmatmul.mubr.f32.gmra.mxu0 %v599
  %v780 = vpop.f32.mrf.mxu0
  %v781 = vadd.f32 %v583, %v780
  %v782 = vpop.f32.mrf.mxu0
  %783 = vmatprep.mubr.f32.mxu0 0.0
  %784 = vmatmul.mubr.f32.gmra.mxu0 %v602
  %v785 = vpop.f32.mrf.mxu0
  %v786 = vadd.f32 %v583, %v785
  %v787 = vpop.f32.mrf.mxu0
  %788 = vmatprep.mubr.f32.mxu0 0.0
  %789 = vmatmul.mubr.f32.gmra.mxu0 %v605
  %v790 = vpop.f32.mrf.mxu0
  %v791 = vadd.f32 %v583, %v790
  %v792 = vpop.f32.mrf.mxu0
  %793 = vmatprep.mubr.f32.mxu0 0.0
  %794 = vmatmul.mubr.f32.gmra.mxu0 %v608
  %v795 = vpop.f32.mrf.mxu0
  %v796 = vadd.f32 %v583, %v795
  %v797 = vpop.f32.mrf.mxu0
  %798 = vmatprep.mubr.f32.mxu0 0.0
  %799 = vmatmul.mubr.f32.gmra.mxu0 %v611
  %v800 = vpop.f32.mrf.mxu0
  %v801 = vadd.f32 %v583, %v800
  %v802 = vpop.f32.mrf.mxu0
  %803 = vmatprep.mubr.f32.mxu0 0.0
  %804 = vmatmul.mubr.f32.gmra.mxu0 %v614
  %v805 = vpop.f32.mrf.mxu0
  %v806 = vadd.f32 %v583, %v805
  %v807 = vpop.f32.mrf.mxu0
  %808 = vmatprep.mubr.f32.mxu0 0.0
  %809 = vmatmul.mubr.f32.gmra.mxu0 %v617
  %v810 = vpop.f32.mrf.mxu0
  %v811 = vadd.f32 %v583, %v810
  %v812 = vpop.f32.mrf.mxu0
  %813 = vmatprep.mubr.f32.mxu0 0.0
  %814 = vmatmul.mubr.f32.gmra.mxu0 %v620
  %v815 = vpop.f32.mrf.mxu0
  %v816 = vadd.f32 %v583, %v815
  %v817 = vpop.f32.mrf.mxu0
  %818 = vmatprep.mubr.f32.mxu0 0.0
  %819 = vmatmul.mubr.f32.gmra.mxu0 %v623
  %v820 = vpop.f32.mrf.mxu0
  %v821 = vadd.f32 %v583, %v820
  %v822 = vpop.f32.mrf.mxu0
  %823 = vmatprep.mubr.f32.mxu0 0.0
  %824 = vmatmul.mubr.f32.gmra.mxu0 %v626
  %v825 = vpop.f32.mrf.mxu0
  %v826 = vadd.f32 %v583, %v825
  %v827 = vpop.f32.mrf.mxu0
  %828 = vmatprep.mubr.f32.mxu0 0.0
  %829 = vmatmul.mubr.f32.gmra.mxu0 %v629
  %v830 = vpop.f32.mrf.mxu0
  %v831 = vadd.f32 %v583, %v830
  %v832 = vpop.f32.mrf.mxu0
  %833 = vmatprep.mubr.f32.mxu0 0.0
  %834 = vmatmul.mubr.f32.gmra.mxu0 %v632
  %v835 = vpop.f32.mrf.mxu0
  %v836 = vadd.f32 %v583, %v835
  %v837 = vpop.f32.mrf.mxu0
  %838 = vmatprep.mubr.f32.mxu0 0.0
  %839 = vmatmul.mubr.f32.gmra.mxu0 %v635
  %v840 = vpop.f32.mrf.mxu0
  %v841 = vadd.f32 %v583, %v840
  %v842 = vpop.f32.mrf.mxu0
  %843 = vmatprep.mubr.f32.mxu0 0.0
  %844 = vmatmul.mubr.f32.gmra.mxu0 %v638
  %v845 = vpop.f32.mrf.mxu0
  %v846 = vadd.f32 %v583, %v845
  %v847 = vpop.f32.mrf.mxu0
  %848 = vmatprep.mubr.f32.mxu0 0.0
  %849 = vmatmul.mubr.f32.gmra.mxu0 %v641
  %v850 = vpop.f32.mrf.mxu0
  %v851 = vadd.f32 %v583, %v850
  %v852 = vpop.f32.mrf.mxu0
  %853 = vmatprep.mubr.f32.mxu0 0.0
  %854 = vmatmul.mubr.f32.gmra.mxu0 %v644
  %v855 = vpop.f32.mrf.mxu0
  %v856 = vadd.f32 %v583, %v855
  %v857 = vpop.f32.mrf.mxu0
  %858 = vmatprep.mubr.f32.mxu0 0.0
  %859 = vmatmul.mubr.f32.gmra.mxu0 %v647
  %v860 = vpop.f32.mrf.mxu0
  %v861 = vadd.f32 %v583, %v860
  %v862 = vpop.f32.mrf.mxu0
  %863 = vmatprep.mubr.f32.mxu0 0.0
  %864 = vmatmul.mubr.f32.gmra.mxu0 %v650
  %v865 = vpop.f32.mrf.mxu0
  %v866 = vadd.f32 %v583, %v865
  %v867 = vpop.f32.mrf.mxu0
  %868 = vmatprep.mubr.f32.mxu0 0.0
  %869 = vmatmul.mubr.f32.gmra.mxu0 %v653
  %v870 = vpop.f32.mrf.mxu0
  %v871 = vadd.f32 %v583, %v870
  %v872 = vpop.f32.mrf.mxu0
  %873 = vmatprep.mubr.f32.mxu0 0.0
  %874 = vmatmul.mubr.f32.gmra.mxu0 %v656
  %v875 = vpop.f32.mrf.mxu0
  %v876 = vadd.f32 %v583, %v875
  %v877 = vpop.f32.mrf.mxu0
  %878 = vmatprep.mubr.f32.mxu0 0.0
  %879 = vmatmul.mubr.f32.gmra.mxu0 %v659
  %v880 = vpop.f32.mrf.mxu0
  %v881 = vadd.f32 %v583, %v880
  %v882 = vpop.f32.mrf.mxu0
  %883 = vmatprep.mubr.f32.mxu0 0.0
  %884 = vmatmul.mubr.f32.gmra.mxu0 %v662
  %v885 = vpop.f32.mrf.mxu0
  %v886 = vadd.f32 %v583, %v885
  %v887 = vpop.f32.mrf.mxu0
  %888 = vmatprep.mubr.f32.mxu0 0.0
  %889 = vmatmul.mubr.f32.gmra.mxu0 %v665
  %v890 = vpop.f32.mrf.mxu0
  %v891 = vadd.f32 %v583, %v890
  %v892 = vpop.f32.mrf.mxu0
  %893 = vmatprep.mubr.f32.mxu0 0.0
  %894 = vmatmul.mubr.f32.gmra.mxu0 %v668
  %v895 = vpop.f32.mrf.mxu0
  %v896 = vadd.f32 %v583, %v895
  %v897 = vpop.f32.mrf.mxu0
  %898 = vmatprep.mubr.f32.mxu0 0.0
  %899 = vmatmul.mubr.f32.gmra.mxu0 %v671
  %v900 = vpop.f32.mrf.mxu0
  %v901 = vadd.f32 %v583, %v900
  %v902 = vpop.f32.mrf.mxu0
  %903 = vmatprep.mubr.f32.mxu0 0.0
  %904 = vmatmul.mubr.f32.gmra.mxu0 %v674
  %v905 = vpop.f32.mrf.mxu0
  %v906 = vadd.f32 %v583, %v905
  %v907 = vpop.f32.mrf.mxu0
  %908 = vmatprep.mubr.f32.mxu0 0.0
  %909 = vmatmul.mubr.f32.gmra.mxu0 %v677
  %v910 = vpop.f32.mrf.mxu0
  %v911 = vadd.f32 %v583, %v910
  %v912 = vpop.f32.mrf.mxu0
  %913 = vmatprep.mubr.f32.mxu0 0.0
  %914 = vmatmul.mubr.f32.gmra.mxu0 %v680
  %v915 = vpop.f32.mrf.mxu0
  %v916 = vadd.f32 %v583, %v915
  %v917 = vpop.f32.mrf.mxu0
  %918 = vmatprep.mubr.f32.mxu0 0.0
  %919 = vmatmul.mubr.f32.gmra.mxu0 %v683
  %v920 = vpop.f32.mrf.mxu0
  %v921 = vadd.f32 %v583, %v920
  %v922 = vpop.f32.mrf.mxu0
  %923 = vmatprep.mubr.f32.mxu0 0.0
  %924 = vmatmul.mubr.f32.gmra.mxu0 %v686
  %v925 = vpop.f32.mrf.mxu0
  %v926 = vadd.f32 %v583, %v925
  %v927 = vpop.f32.mrf.mxu0
  %928 = vmatprep.mubr.f32.mxu0 0.0
  %929 = vmatmul.mubr.f32.gmra.mxu0 %v689
  %v930 = vpop.f32.mrf.mxu0
  %v931 = vadd.f32 %v583, %v930
  %v932 = vpop.f32.mrf.mxu0
  %933 = vmatprep.mubr.f32.mxu0 0.0
  %934 = vmatmul.mubr.f32.gmra.mxu0 %v692
  %v935 = vpop.f32.mrf.mxu0
  %v936 = vadd.f32 %v583, %v935
  %v937 = vpop.f32.mrf.mxu0
  %938 = vdwg.mxu0
  %975 = vrot.lane.b32.xlu0 %v761, 122
  %v976 = vpop.permute.xlu0 %975
  %977 = vrot.lane.b32.xlu0 %v766, 122
  %v978 = vpop.permute.xlu0 %977
  %979 = vrot.lane.b32.xlu0 %v771, 122
  %v980 = vpop.permute.xlu0 %979
  %981 = vrot.lane.b32.xlu0 %v776, 122
  %v982 = vpop.permute.xlu0 %981
  %983 = vrot.lane.b32.xlu0 %v781, 122
  %v984 = vpop.permute.xlu0 %983
  %985 = vrot.lane.b32.xlu0 %v786, 122
  %v986 = vpop.permute.xlu0 %985
  %987 = vrot.lane.b32.xlu0 %v791, 122
  %v988 = vpop.permute.xlu0 %987
  %989 = vrot.lane.b32.xlu0 %v796, 122
  %v990 = vpop.permute.xlu0 %989
  %991 = vrot.lane.b32.xlu0 %v801, 122
  %v992 = vpop.permute.xlu0 %991
  %993 = vrot.lane.b32.xlu0 %v806, 122
  %v994 = vpop.permute.xlu0 %993
  %995 = vrot.lane.b32.xlu0 %v811, 122
  %v996 = vpop.permute.xlu0 %995
  %997 = vrot.lane.b32.xlu0 %v816, 122
  %v998 = vpop.permute.xlu0 %997
  %999 = vrot.lane.b32.xlu0 %v821, 122
  %v1000 = vpop.permute.xlu0 %999
  %1001 = vrot.lane.b32.xlu0 %v826, 122
  %v1002 = vpop.permute.xlu0 %1001
  %1003 = vrot.lane.b32.xlu0 %v831, 122
  %v1004 = vpop.permute.xlu0 %1003
  %1005 = vrot.lane.b32.xlu0 %v836, 122
  %v1006 = vpop.permute.xlu0 %1005
  %1007 = vrot.lane.b32.xlu0 %v841, 122
  %v1008 = vpop.permute.xlu0 %1007
  %1009 = vrot.lane.b32.xlu0 %v846, 122
  %v1010 = vpop.permute.xlu0 %1009
  %1011 = vrot.lane.b32.xlu0 %v851, 122
  %v1012 = vpop.permute.xlu0 %1011
  %1013 = vrot.lane.b32.xlu0 %v856, 122
  %v1014 = vpop.permute.xlu0 %1013
  %1015 = vrot.lane.b32.xlu0 %v861, 122
  %v1016 = vpop.permute.xlu0 %1015
  %1017 = vrot.lane.b32.xlu0 %v866, 122
  %v1018 = vpop.permute.xlu0 %1017
  %1019 = vrot.lane.b32.xlu0 %v871, 122
  %v1020 = vpop.permute.xlu0 %1019
  %1021 = vrot.lane.b32.xlu0 %v876, 122
  %v1022 = vpop.permute.xlu0 %1021
  %1023 = vrot.lane.b32.xlu0 %v881, 122
  %v1024 = vpop.permute.xlu0 %1023
  %1025 = vrot.lane.b32.xlu0 %v886, 122
  %v1026 = vpop.permute.xlu0 %1025
  %1027 = vrot.lane.b32.xlu0 %v891, 122
  %v1028 = vpop.permute.xlu0 %1027
  %1029 = vrot.lane.b32.xlu0 %v896, 122
  %v1030 = vpop.permute.xlu0 %1029
  %1031 = vrot.lane.b32.xlu0 %v901, 122
  %v1032 = vpop.permute.xlu0 %1031
  %1033 = vrot.lane.b32.xlu0 %v906, 122
  %v1034 = vpop.permute.xlu0 %1033
  %1035 = vrot.lane.b32.xlu0 %v911, 122
  %v1036 = vpop.permute.xlu0 %1035
  %1037 = vrot.lane.b32.xlu0 %v916, 122
  %v1038 = vpop.permute.xlu0 %1037
  %1039 = vrot.lane.b32.xlu0 %v921, 122
  %v1040 = vpop.permute.xlu0 %1039
  %1041 = vrot.lane.b32.xlu0 %v926, 122
  %v1042 = vpop.permute.xlu0 %1041
  %1043 = vrot.lane.b32.xlu0 %v931, 122
  %v1044 = vpop.permute.xlu0 %1043
  %1045 = vrot.lane.b32.xlu0 %v936, 122
  %v1046 = vpop.permute.xlu0 %1045
  %v1083 = vmax.f32 %v761, %v976
  %v1084 = vmax.f32 %v766, %v978
  %v1085 = vmax.f32 %v771, %v980
  %v1086 = vmax.f32 %v776, %v982
  %v1087 = vmax.f32 %v781, %v984
  %v1088 = vmax.f32 %v786, %v986
  %v1089 = vmax.f32 %v791, %v988
  %v1090 = vmax.f32 %v796, %v990
  %v1091 = vmax.f32 %v801, %v992
  %v1092 = vmax.f32 %v806, %v994
  %v1093 = vmax.f32 %v811, %v996
  %v1094 = vmax.f32 %v816, %v998
  %v1095 = vmax.f32 %v821, %v1000
  %v1096 = vmax.f32 %v826, %v1002
  %v1097 = vmax.f32 %v831, %v1004
  %v1098 = vmax.f32 %v836, %v1006
  %v1099 = vmax.f32 %v841, %v1008
  %v1100 = vmax.f32 %v846, %v1010
  %v1101 = vmax.f32 %v851, %v1012
  %v1102 = vmax.f32 %v856, %v1014
  %v1103 = vmax.f32 %v861, %v1016
  %v1104 = vmax.f32 %v866, %v1018
  %v1105 = vmax.f32 %v871, %v1020
  %v1106 = vmax.f32 %v876, %v1022
  %v1107 = vmax.f32 %v881, %v1024
  %v1108 = vmax.f32 %v886, %v1026
  %v1109 = vmax.f32 %v891, %v1028
  %v1110 = vmax.f32 %v896, %v1030
  %v1111 = vmax.f32 %v901, %v1032
  %v1112 = vmax.f32 %v906, %v1034
  %v1113 = vmax.f32 %v911, %v1036
  %v1114 = vmax.f32 %v916, %v1038
  %v1115 = vmax.f32 %v921, %v1040
  %v1116 = vmax.f32 %v926, %v1042
  %v1117 = vmax.f32 %v931, %v1044
  %v1118 = vmax.f32 %v936, %v1046
  %1155 = vrot.lane.b32.xlu0 %v1083, 116
  %v1156 = vpop.permute.xlu0 %1155
  %1157 = vrot.lane.b32.xlu0 %v1084, 116
  %v1158 = vpop.permute.xlu0 %1157
  %1159 = vrot.lane.b32.xlu0 %v1085, 116
  %v1160 = vpop.permute.xlu0 %1159
  %1161 = vrot.lane.b32.xlu0 %v1086, 116
  %v1162 = vpop.permute.xlu0 %1161
  %1163 = vrot.lane.b32.xlu0 %v1087, 116
  %v1164 = vpop.permute.xlu0 %1163
  %1165 = vrot.lane.b32.xlu0 %v1088, 116
  %v1166 = vpop.permute.xlu0 %1165
  %1167 = vrot.lane.b32.xlu0 %v1089, 116
  %v1168 = vpop.permute.xlu0 %1167
  %1169 = vrot.lane.b32.xlu0 %v1090, 116
  %v1170 = vpop.permute.xlu0 %1169
  %1171 = vrot.lane.b32.xlu0 %v1091, 116
  %v1172 = vpop.permute.xlu0 %1171
  %1173 = vrot.lane.b32.xlu0 %v1092, 116
  %v1174 = vpop.permute.xlu0 %1173
  %1175 = vrot.lane.b32.xlu0 %v1093, 116
  %v1176 = vpop.permute.xlu0 %1175
  %1177 = vrot.lane.b32.xlu0 %v1094, 116
  %v1178 = vpop.permute.xlu0 %1177
  %1179 = vrot.lane.b32.xlu0 %v1095, 116
  %v1180 = vpop.permute.xlu0 %1179
  %1181 = vrot.lane.b32.xlu0 %v1096, 116
  %v1182 = vpop.permute.xlu0 %1181
  %1183 = vrot.lane.b32.xlu0 %v1097, 116
  %v1184 = vpop.permute.xlu0 %1183
  %1185 = vrot.lane.b32.xlu0 %v1098, 116
  %v1186 = vpop.permute.xlu0 %1185
  %1187 = vrot.lane.b32.xlu0 %v1099, 116
  %v1188 = vpop.permute.xlu0 %1187
  %1189 = vrot.lane.b32.xlu0 %v1100, 116
  %v1190 = vpop.permute.xlu0 %1189
  %1191 = vrot.lane.b32.xlu0 %v1101, 116
  %v1192 = vpop.permute.xlu0 %1191
  %1193 = vrot.lane.b32.xlu0 %v1102, 116
  %v1194 = vpop.permute.xlu0 %1193
  %1195 = vrot.lane.b32.xlu0 %v1103, 116
  %v1196 = vpop.permute.xlu0 %1195
  %1197 = vrot.lane.b32.xlu0 %v1104, 116
  %v1198 = vpop.permute.xlu0 %1197
  %1199 = vrot.lane.b32.xlu0 %v1105, 116
  %v1200 = vpop.permute.xlu0 %1199
  %1201 = vrot.lane.b32.xlu0 %v1106, 116
  %v1202 = vpop.permute.xlu0 %1201
  %1203 = vrot.lane.b32.xlu0 %v1107, 116
  %v1204 = vpop.permute.xlu0 %1203
  %1205 = vrot.lane.b32.xlu0 %v1108, 116
  %v1206 = vpop.permute.xlu0 %1205
  %1207 = vrot.lane.b32.xlu0 %v1109, 116
  %v1208 = vpop.permute.xlu0 %1207
  %1209 = vrot.lane.b32.xlu0 %v1110, 116
  %v1210 = vpop.permute.xlu0 %1209
  %1211 = vrot.lane.b32.xlu0 %v1111, 116
  %v1212 = vpop.permute.xlu0 %1211
  %1213 = vrot.lane.b32.xlu0 %v1112, 116
  %v1214 = vpop.permute.xlu0 %1213
  %1215 = vrot.lane.b32.xlu0 %v1113, 116
  %v1216 = vpop.permute.xlu0 %1215
  %1217 = vrot.lane.b32.xlu0 %v1114, 116
  %v1218 = vpop.permute.xlu0 %1217
  %1219 = vrot.lane.b32.xlu0 %v1115, 116
  %v1220 = vpop.permute.xlu0 %1219
  %1221 = vrot.lane.b32.xlu0 %v1116, 116
  %v1222 = vpop.permute.xlu0 %1221
  %1223 = vrot.lane.b32.xlu0 %v1117, 116
  %v1224 = vpop.permute.xlu0 %1223
  %1225 = vrot.lane.b32.xlu0 %v1118, 116
  %v1226 = vpop.permute.xlu0 %1225
  %v1263 = vmax.f32 %v1083, %v1156
  %v1264 = vmax.f32 %v1084, %v1158
  %v1265 = vmax.f32 %v1085, %v1160
  %v1266 = vmax.f32 %v1086, %v1162
  %v1267 = vmax.f32 %v1087, %v1164
  %v1268 = vmax.f32 %v1088, %v1166
  %v1269 = vmax.f32 %v1089, %v1168
  %v1270 = vmax.f32 %v1090, %v1170
  %v1271 = vmax.f32 %v1091, %v1172
  %v1272 = vmax.f32 %v1092, %v1174
  %v1273 = vmax.f32 %v1093, %v1176
  %v1274 = vmax.f32 %v1094, %v1178
  %v1275 = vmax.f32 %v1095, %v1180
  %v1276 = vmax.f32 %v1096, %v1182
  %v1277 = vmax.f32 %v1097, %v1184
  %v1278 = vmax.f32 %v1098, %v1186
  %v1279 = vmax.f32 %v1099, %v1188
  %v1280 = vmax.f32 %v1100, %v1190
  %v1281 = vmax.f32 %v1101, %v1192
  %v1282 = vmax.f32 %v1102, %v1194
  %v1283 = vmax.f32 %v1103, %v1196
  %v1284 = vmax.f32 %v1104, %v1198
  %v1285 = vmax.f32 %v1105, %v1200
  %v1286 = vmax.f32 %v1106, %v1202
  %v1287 = vmax.f32 %v1107, %v1204
  %v1288 = vmax.f32 %v1108, %v1206
  %v1289 = vmax.f32 %v1109, %v1208
  %v1290 = vmax.f32 %v1110, %v1210
  %v1291 = vmax.f32 %v1111, %v1212
  %v1292 = vmax.f32 %v1112, %v1214
  %v1293 = vmax.f32 %v1113, %v1216
  %v1294 = vmax.f32 %v1114, %v1218
  %v1295 = vmax.f32 %v1115, %v1220
  %v1296 = vmax.f32 %v1116, %v1222
  %v1297 = vmax.f32 %v1117, %v1224
  %v1298 = vmax.f32 %v1118, %v1226
  %1335 = vrot.lane.b32.xlu0 %v1263, 110
  %v1336 = vpop.permute.xlu0 %1335
  %1337 = vrot.lane.b32.xlu0 %v1264, 110
  %v1338 = vpop.permute.xlu0 %1337
  %1339 = vrot.lane.b32.xlu0 %v1265, 110
  %v1340 = vpop.permute.xlu0 %1339
  %1341 = vrot.lane.b32.xlu0 %v1266, 110
  %v1342 = vpop.permute.xlu0 %1341
  %1343 = vrot.lane.b32.xlu0 %v1267, 110
  %v1344 = vpop.permute.xlu0 %1343
  %1345 = vrot.lane.b32.xlu0 %v1268, 110
  %v1346 = vpop.permute.xlu0 %1345
  %1347 = vrot.lane.b32.xlu0 %v1269, 110
  %v1348 = vpop.permute.xlu0 %1347
  %1349 = vrot.lane.b32.xlu0 %v1270, 110
  %v1350 = vpop.permute.xlu0 %1349
  %1351 = vrot.lane.b32.xlu0 %v1271, 110
  %v1352 = vpop.permute.xlu0 %1351
  %1353 = vrot.lane.b32.xlu0 %v1272, 110
  %v1354 = vpop.permute.xlu0 %1353
  %1355 = vrot.lane.b32.xlu0 %v1273, 110
  %v1356 = vpop.permute.xlu0 %1355
  %1357 = vrot.lane.b32.xlu0 %v1274, 110
  %v1358 = vpop.permute.xlu0 %1357
  %1359 = vrot.lane.b32.xlu0 %v1275, 110
  %v1360 = vpop.permute.xlu0 %1359
  %1361 = vrot.lane.b32.xlu0 %v1276, 110
  %v1362 = vpop.permute.xlu0 %1361
  %1363 = vrot.lane.b32.xlu0 %v1277, 110
  %v1364 = vpop.permute.xlu0 %1363
  %1365 = vrot.lane.b32.xlu0 %v1278, 110
  %v1366 = vpop.permute.xlu0 %1365
  %1367 = vrot.lane.b32.xlu0 %v1279, 110
  %v1368 = vpop.permute.xlu0 %1367
  %1369 = vrot.lane.b32.xlu0 %v1280, 110
  %v1370 = vpop.permute.xlu0 %1369
  %1371 = vrot.lane.b32.xlu0 %v1281, 110
  %v1372 = vpop.permute.xlu0 %1371
  %1373 = vrot.lane.b32.xlu0 %v1282, 110
  %v1374 = vpop.permute.xlu0 %1373
  %1375 = vrot.lane.b32.xlu0 %v1283, 110
  %v1376 = vpop.permute.xlu0 %1375
  %1377 = vrot.lane.b32.xlu0 %v1284, 110
  %v1378 = vpop.permute.xlu0 %1377
  %1379 = vrot.lane.b32.xlu0 %v1285, 110
  %v1380 = vpop.permute.xlu0 %1379
  %1381 = vrot.lane.b32.xlu0 %v1286, 110
  %v1382 = vpop.permute.xlu0 %1381
  %1383 = vrot.lane.b32.xlu0 %v1287, 110
  %v1384 = vpop.permute.xlu0 %1383
  %1385 = vrot.lane.b32.xlu0 %v1288, 110
  %v1386 = vpop.permute.xlu0 %1385
  %1387 = vrot.lane.b32.xlu0 %v1289, 110
  %v1388 = vpop.permute.xlu0 %1387
  %1389 = vrot.lane.b32.xlu0 %v1290, 110
  %v1390 = vpop.permute.xlu0 %1389
  %1391 = vrot.lane.b32.xlu0 %v1291, 110
  %v1392 = vpop.permute.xlu0 %1391
  %1393 = vrot.lane.b32.xlu0 %v1292, 110
  %v1394 = vpop.permute.xlu0 %1393
  %1395 = vrot.lane.b32.xlu0 %v1293, 110
  %v1396 = vpop.permute.xlu0 %1395
  %1397 = vrot.lane.b32.xlu0 %v1294, 110
  %v1398 = vpop.permute.xlu0 %1397
  %1399 = vrot.lane.b32.xlu0 %v1295, 110
  %v1400 = vpop.permute.xlu0 %1399
  %1401 = vrot.lane.b32.xlu0 %v1296, 110
  %v1402 = vpop.permute.xlu0 %1401
  %1403 = vrot.lane.b32.xlu0 %v1297, 110
  %v1404 = vpop.permute.xlu0 %1403
  %1405 = vrot.lane.b32.xlu0 %v1298, 110
  %v1406 = vpop.permute.xlu0 %1405
  %1443 = vrot.lane.b32.xlu0 %v1263, 92
  %v1444 = vpop.permute.xlu0 %1443
  %1445 = vrot.lane.b32.xlu0 %v1264, 92
  %v1446 = vpop.permute.xlu0 %1445
  %1447 = vrot.lane.b32.xlu0 %v1265, 92
  %v1448 = vpop.permute.xlu0 %1447
  %1449 = vrot.lane.b32.xlu0 %v1266, 92
  %v1450 = vpop.permute.xlu0 %1449
  %1451 = vrot.lane.b32.xlu0 %v1267, 92
  %v1452 = vpop.permute.xlu0 %1451
  %1453 = vrot.lane.b32.xlu0 %v1268, 92
  %v1454 = vpop.permute.xlu0 %1453
  %1455 = vrot.lane.b32.xlu0 %v1269, 92
  %v1456 = vpop.permute.xlu0 %1455
  %1457 = vrot.lane.b32.xlu0 %v1270, 92
  %v1458 = vpop.permute.xlu0 %1457
  %1459 = vrot.lane.b32.xlu0 %v1271, 92
  %v1460 = vpop.permute.xlu0 %1459
  %1461 = vrot.lane.b32.xlu0 %v1272, 92
  %v1462 = vpop.permute.xlu0 %1461
  %1463 = vrot.lane.b32.xlu0 %v1273, 92
  %v1464 = vpop.permute.xlu0 %1463
  %1465 = vrot.lane.b32.xlu0 %v1274, 92
  %v1466 = vpop.permute.xlu0 %1465
  %1467 = vrot.lane.b32.xlu0 %v1275, 92
  %v1468 = vpop.permute.xlu0 %1467
  %1469 = vrot.lane.b32.xlu0 %v1276, 92
  %v1470 = vpop.permute.xlu0 %1469
  %1471 = vrot.lane.b32.xlu0 %v1277, 92
  %v1472 = vpop.permute.xlu0 %1471
  %1473 = vrot.lane.b32.xlu0 %v1278, 92
  %v1474 = vpop.permute.xlu0 %1473
  %1475 = vrot.lane.b32.xlu0 %v1279, 92
  %v1476 = vpop.permute.xlu0 %1475
  %1477 = vrot.lane.b32.xlu0 %v1280, 92
  %v1478 = vpop.permute.xlu0 %1477
  %1479 = vrot.lane.b32.xlu0 %v1281, 92
  %v1480 = vpop.permute.xlu0 %1479
  %1481 = vrot.lane.b32.xlu0 %v1282, 92
  %v1482 = vpop.permute.xlu0 %1481
  %1483 = vrot.lane.b32.xlu0 %v1283, 92
  %v1484 = vpop.permute.xlu0 %1483
  %1485 = vrot.lane.b32.xlu0 %v1284, 92
  %v1486 = vpop.permute.xlu0 %1485
  %1487 = vrot.lane.b32.xlu0 %v1285, 92
  %v1488 = vpop.permute.xlu0 %1487
  %1489 = vrot.lane.b32.xlu0 %v1286, 92
  %v1490 = vpop.permute.xlu0 %1489
  %1491 = vrot.lane.b32.xlu0 %v1287, 92
  %v1492 = vpop.permute.xlu0 %1491
  %1493 = vrot.lane.b32.xlu0 %v1288, 92
  %v1494 = vpop.permute.xlu0 %1493
  %1495 = vrot.lane.b32.xlu0 %v1289, 92
  %v1496 = vpop.permute.xlu0 %1495
  %1497 = vrot.lane.b32.xlu0 %v1290, 92
  %v1498 = vpop.permute.xlu0 %1497
  %1499 = vrot.lane.b32.xlu0 %v1291, 92
  %v1500 = vpop.permute.xlu0 %1499
  %1501 = vrot.lane.b32.xlu0 %v1292, 92
  %v1502 = vpop.permute.xlu0 %1501
  %1503 = vrot.lane.b32.xlu0 %v1293, 92
  %v1504 = vpop.permute.xlu0 %1503
  %1505 = vrot.lane.b32.xlu0 %v1294, 92
  %v1506 = vpop.permute.xlu0 %1505
  %1507 = vrot.lane.b32.xlu0 %v1295, 92
  %v1508 = vpop.permute.xlu0 %1507
  %1509 = vrot.lane.b32.xlu0 %v1296, 92
  %v1510 = vpop.permute.xlu0 %1509
  %1511 = vrot.lane.b32.xlu0 %v1297, 92
  %v1512 = vpop.permute.xlu0 %1511
  %1513 = vrot.lane.b32.xlu0 %v1298, 92
  %v1514 = vpop.permute.xlu0 %1513
  %1551 = vrot.lane.b32.xlu0 %v1263, 74
  %v1552 = vpop.permute.xlu0 %1551
  %1553 = vrot.lane.b32.xlu0 %v1264, 74
  %v1554 = vpop.permute.xlu0 %1553
  %1555 = vrot.lane.b32.xlu0 %v1265, 74
  %v1556 = vpop.permute.xlu0 %1555
  %1557 = vrot.lane.b32.xlu0 %v1266, 74
  %v1558 = vpop.permute.xlu0 %1557
  %1559 = vrot.lane.b32.xlu0 %v1267, 74
  %v1560 = vpop.permute.xlu0 %1559
  %1561 = vrot.lane.b32.xlu0 %v1268, 74
  %v1562 = vpop.permute.xlu0 %1561
  %1563 = vrot.lane.b32.xlu0 %v1269, 74
  %v1564 = vpop.permute.xlu0 %1563
  %1565 = vrot.lane.b32.xlu0 %v1270, 74
  %v1566 = vpop.permute.xlu0 %1565
  %1567 = vrot.lane.b32.xlu0 %v1271, 74
  %v1568 = vpop.permute.xlu0 %1567
  %1569 = vrot.lane.b32.xlu0 %v1272, 74
  %v1570 = vpop.permute.xlu0 %1569
  %1571 = vrot.lane.b32.xlu0 %v1273, 74
  %v1572 = vpop.permute.xlu0 %1571
  %1573 = vrot.lane.b32.xlu0 %v1274, 74
  %v1574 = vpop.permute.xlu0 %1573
  %1575 = vrot.lane.b32.xlu0 %v1275, 74
  %v1576 = vpop.permute.xlu0 %1575
  %1577 = vrot.lane.b32.xlu0 %v1276, 74
  %v1578 = vpop.permute.xlu0 %1577
  %1579 = vrot.lane.b32.xlu0 %v1277, 74
  %v1580 = vpop.permute.xlu0 %1579
  %1581 = vrot.lane.b32.xlu0 %v1278, 74
  %v1582 = vpop.permute.xlu0 %1581
  %1583 = vrot.lane.b32.xlu0 %v1279, 74
  %v1584 = vpop.permute.xlu0 %1583
  %1585 = vrot.lane.b32.xlu0 %v1280, 74
  %v1586 = vpop.permute.xlu0 %1585
  %1587 = vrot.lane.b32.xlu0 %v1281, 74
  %v1588 = vpop.permute.xlu0 %1587
  %1589 = vrot.lane.b32.xlu0 %v1282, 74
  %v1590 = vpop.permute.xlu0 %1589
  %1591 = vrot.lane.b32.xlu0 %v1283, 74
  %v1592 = vpop.permute.xlu0 %1591
  %1593 = vrot.lane.b32.xlu0 %v1284, 74
  %v1594 = vpop.permute.xlu0 %1593
  %1595 = vrot.lane.b32.xlu0 %v1285, 74
  %v1596 = vpop.permute.xlu0 %1595
  %1597 = vrot.lane.b32.xlu0 %v1286, 74
  %v1598 = vpop.permute.xlu0 %1597
  %1599 = vrot.lane.b32.xlu0 %v1287, 74
  %v1600 = vpop.permute.xlu0 %1599
  %1601 = vrot.lane.b32.xlu0 %v1288, 74
  %v1602 = vpop.permute.xlu0 %1601
  %1603 = vrot.lane.b32.xlu0 %v1289, 74
  %v1604 = vpop.permute.xlu0 %1603
  %1605 = vrot.lane.b32.xlu0 %v1290, 74
  %v1606 = vpop.permute.xlu0 %1605
  %1607 = vrot.lane.b32.xlu0 %v1291, 74
  %v1608 = vpop.permute.xlu0 %1607
  %1609 = vrot.lane.b32.xlu0 %v1292, 74
  %v1610 = vpop.permute.xlu0 %1609
  %1611 = vrot.lane.b32.xlu0 %v1293, 74
  %v1612 = vpop.permute.xlu0 %1611
  %1613 = vrot.lane.b32.xlu0 %v1294, 74
  %v1614 = vpop.permute.xlu0 %1613
  %1615 = vrot.lane.b32.xlu0 %v1295, 74
  %v1616 = vpop.permute.xlu0 %1615
  %1617 = vrot.lane.b32.xlu0 %v1296, 74
  %v1618 = vpop.permute.xlu0 %1617
  %1619 = vrot.lane.b32.xlu0 %v1297, 74
  %v1620 = vpop.permute.xlu0 %1619
  %1621 = vrot.lane.b32.xlu0 %v1298, 74
  %v1622 = vpop.permute.xlu0 %1621
  %vm1659 = vcmask 48128
  %v1660 = vsel %vm1659, %v1263, %v1336
  %v1661 = vsel %vm1659, %v1264, %v1338
  %v1662 = vsel %vm1659, %v1265, %v1340
  %v1663 = vsel %vm1659, %v1266, %v1342
  %v1664 = vsel %vm1659, %v1267, %v1344
  %v1665 = vsel %vm1659, %v1268, %v1346
  %v1666 = vsel %vm1659, %v1269, %v1348
  %v1667 = vsel %vm1659, %v1270, %v1350
  %v1668 = vsel %vm1659, %v1271, %v1352
  %v1669 = vsel %vm1659, %v1272, %v1354
  %v1670 = vsel %vm1659, %v1273, %v1356
  %v1671 = vsel %vm1659, %v1274, %v1358
  %v1672 = vsel %vm1659, %v1275, %v1360
  %v1673 = vsel %vm1659, %v1276, %v1362
  %v1674 = vsel %vm1659, %v1277, %v1364
  %v1675 = vsel %vm1659, %v1278, %v1366
  %v1676 = vsel %vm1659, %v1279, %v1368
  %v1677 = vsel %vm1659, %v1280, %v1370
  %v1678 = vsel %vm1659, %v1281, %v1372
  %v1679 = vsel %vm1659, %v1282, %v1374
  %v1680 = vsel %vm1659, %v1283, %v1376
  %v1681 = vsel %vm1659, %v1284, %v1378
  %v1682 = vsel %vm1659, %v1285, %v1380
  %v1683 = vsel %vm1659, %v1286, %v1382
  %v1684 = vsel %vm1659, %v1287, %v1384
  %v1685 = vsel %vm1659, %v1288, %v1386
  %v1686 = vsel %vm1659, %v1289, %v1388
  %v1687 = vsel %vm1659, %v1290, %v1390
  %v1688 = vsel %vm1659, %v1291, %v1392
  %v1689 = vsel %vm1659, %v1292, %v1394
  %v1690 = vsel %vm1659, %v1293, %v1396
  %v1691 = vsel %vm1659, %v1294, %v1398
  %v1692 = vsel %vm1659, %v1295, %v1400
  %v1693 = vsel %vm1659, %v1296, %v1402
  %v1694 = vsel %vm1659, %v1297, %v1404
  %v1695 = vsel %vm1659, %v1298, %v1406
  %vm1696 = vcmask 97280
  %v1697 = vsel %vm1696, %v1660, %v1444
  %v1698 = vsel %vm1696, %v1661, %v1446
  %v1699 = vsel %vm1696, %v1662, %v1448
  %v1700 = vsel %vm1696, %v1663, %v1450
  %v1701 = vsel %vm1696, %v1664, %v1452
  %v1702 = vsel %vm1696, %v1665, %v1454
  %v1703 = vsel %vm1696, %v1666, %v1456
  %v1704 = vsel %vm1696, %v1667, %v1458
  %v1705 = vsel %vm1696, %v1668, %v1460
  %v1706 = vsel %vm1696, %v1669, %v1462
  %v1707 = vsel %vm1696, %v1670, %v1464
  %v1708 = vsel %vm1696, %v1671, %v1466
  %v1709 = vsel %vm1696, %v1672, %v1468
  %v1710 = vsel %vm1696, %v1673, %v1470
  %v1711 = vsel %vm1696, %v1674, %v1472
  %v1712 = vsel %vm1696, %v1675, %v1474
  %v1713 = vsel %vm1696, %v1676, %v1476
  %v1714 = vsel %vm1696, %v1677, %v1478
  %v1715 = vsel %vm1696, %v1678, %v1480
  %v1716 = vsel %vm1696, %v1679, %v1482
  %v1717 = vsel %vm1696, %v1680, %v1484
  %v1718 = vsel %vm1696, %v1681, %v1486
  %v1719 = vsel %vm1696, %v1682, %v1488
  %v1720 = vsel %vm1696, %v1683, %v1490
  %v1721 = vsel %vm1696, %v1684, %v1492
  %v1722 = vsel %vm1696, %v1685, %v1494
  %v1723 = vsel %vm1696, %v1686, %v1496
  %v1724 = vsel %vm1696, %v1687, %v1498
  %v1725 = vsel %vm1696, %v1688, %v1500
  %v1726 = vsel %vm1696, %v1689, %v1502
  %v1727 = vsel %vm1696, %v1690, %v1504
  %v1728 = vsel %vm1696, %v1691, %v1506
  %v1729 = vsel %vm1696, %v1692, %v1508
  %v1730 = vsel %vm1696, %v1693, %v1510
  %v1731 = vsel %vm1696, %v1694, %v1512
  %v1732 = vsel %vm1696, %v1695, %v1514
  %vm1733 = vcmask 146432
  %v1734 = vsel %vm1733, %v1697, %v1552
  %v1735 = vsel %vm1733, %v1698, %v1554
  %v1736 = vsel %vm1733, %v1699, %v1556
  %v1737 = vsel %vm1733, %v1700, %v1558
  %v1738 = vsel %vm1733, %v1701, %v1560
  %v1739 = vsel %vm1733, %v1702, %v1562
  %v1740 = vsel %vm1733, %v1703, %v1564
  %v1741 = vsel %vm1733, %v1704, %v1566
  %v1742 = vsel %vm1733, %v1705, %v1568
  %v1743 = vsel %vm1733, %v1706, %v1570
  %v1744 = vsel %vm1733, %v1707, %v1572
  %v1745 = vsel %vm1733, %v1708, %v1574
  %v1746 = vsel %vm1733, %v1709, %v1576
  %v1747 = vsel %vm1733, %v1710, %v1578
  %v1748 = vsel %vm1733, %v1711, %v1580
  %v1749 = vsel %vm1733, %v1712, %v1582
  %v1750 = vsel %vm1733, %v1713, %v1584
  %v1751 = vsel %vm1733, %v1714, %v1586
  %v1752 = vsel %vm1733, %v1715, %v1588
  %v1753 = vsel %vm1733, %v1716, %v1590
  %v1754 = vsel %vm1733, %v1717, %v1592
  %v1755 = vsel %vm1733, %v1718, %v1594
  %v1756 = vsel %vm1733, %v1719, %v1596
  %v1757 = vsel %vm1733, %v1720, %v1598
  %v1758 = vsel %vm1733, %v1721, %v1600
  %v1759 = vsel %vm1733, %v1722, %v1602
  %v1760 = vsel %vm1733, %v1723, %v1604
  %v1761 = vsel %vm1733, %v1724, %v1606
  %v1762 = vsel %vm1733, %v1725, %v1608
  %v1763 = vsel %vm1733, %v1726, %v1610
  %v1764 = vsel %vm1733, %v1727, %v1612
  %v1765 = vsel %vm1733, %v1728, %v1614
  %v1766 = vsel %vm1733, %v1729, %v1616
  %v1767 = vsel %vm1733, %v1730, %v1618
  %v1768 = vsel %vm1733, %v1731, %v1620
  %v1769 = vsel %vm1733, %v1732, %v1622
  %v1770 = vmax.f32 %v1734, 0.0
  %v1771 = vmax.f32 %v1735, 0.0
  %v1772 = vmax.f32 %v1736, 0.0
  %v1773 = vmax.f32 %v1737, 0.0
  %v1774 = vmax.f32 %v1738, 0.0
  %v1775 = vmax.f32 %v1739, 0.0
  %v1776 = vmax.f32 %v1740, 0.0
  %v1777 = vmax.f32 %v1741, 0.0
  %v1778 = vmax.f32 %v1742, 0.0
  %v1779 = vmax.f32 %v1743, 0.0
  %v1780 = vmax.f32 %v1744, 0.0
  %v1781 = vmax.f32 %v1745, 0.0
  %v1782 = vmax.f32 %v1746, 0.0
  %v1783 = vmax.f32 %v1747, 0.0
  %v1784 = vmax.f32 %v1748, 0.0
  %v1785 = vmax.f32 %v1749, 0.0
  %v1786 = vmax.f32 %v1750, 0.0
  %v1787 = vmax.f32 %v1751, 0.0
  %v1788 = vmax.f32 %v1752, 0.0
  %v1789 = vmax.f32 %v1753, 0.0
  %v1790 = vmax.f32 %v1754, 0.0
  %v1791 = vmax.f32 %v1755, 0.0
  %v1792 = vmax.f32 %v1756, 0.0
  %v1793 = vmax.f32 %v1757, 0.0
  %v1794 = vmax.f32 %v1758, 0.0
  %v1795 = vmax.f32 %v1759, 0.0
  %v1796 = vmax.f32 %v1760, 0.0
  %v1797 = vmax.f32 %v1761, 0.0
  %v1798 = vmax.f32 %v1762, 0.0
  %v1799 = vmax.f32 %v1763, 0.0
  %v1800 = vmax.f32 %v1764, 0.0
  %v1801 = vmax.f32 %v1765, 0.0
  %v1802 = vmax.f32 %v1766, 0.0
  %v1803 = vmax.f32 %v1767, 0.0
  %v1804 = vmax.f32 %v1768, 0.0
  %v1805 = vmax.f32 %v1769, 0.0
  %1822 = vrot.lane.b32.xlu0 %v1771, 24
  %v1823 = vpop.permute.xlu0 %1822
  %1824 = vrot.lane.b32.xlu0 %v1772, 24
  %v1825 = vpop.permute.xlu0 %1824
  %1826 = vrot.lane.b32.xlu0 %v1773, 24
  %v1827 = vpop.permute.xlu0 %1826
  %1828 = vrot.lane.b32.xlu0 %v1774, 24
  %v1829 = vpop.permute.xlu0 %1828
  %1830 = vrot.lane.b32.xlu0 %v1777, 24
  %v1831 = vpop.permute.xlu0 %1830
  %1832 = vrot.lane.b32.xlu0 %v1778, 24
  %v1833 = vpop.permute.xlu0 %1832
  %1834 = vrot.lane.b32.xlu0 %v1779, 24
  %v1835 = vpop.permute.xlu0 %1834
  %1836 = vrot.lane.b32.xlu0 %v1780, 24
  %v1837 = vpop.permute.xlu0 %1836
  %1838 = vrot.lane.b32.xlu0 %v1783, 24
  %v1839 = vpop.permute.xlu0 %1838
  %1840 = vrot.lane.b32.xlu0 %v1784, 24
  %v1841 = vpop.permute.xlu0 %1840
  %1842 = vrot.lane.b32.xlu0 %v1785, 24
  %v1843 = vpop.permute.xlu0 %1842
  %1844 = vrot.lane.b32.xlu0 %v1786, 24
  %v1845 = vpop.permute.xlu0 %1844
  %1846 = vrot.lane.b32.xlu0 %v1789, 24
  %v1847 = vpop.permute.xlu0 %1846
  %1848 = vrot.lane.b32.xlu0 %v1790, 24
  %v1849 = vpop.permute.xlu0 %1848
  %1850 = vrot.lane.b32.xlu0 %v1791, 24
  %v1851 = vpop.permute.xlu0 %1850
  %1852 = vrot.lane.b32.xlu0 %v1792, 24
  %v1853 = vpop.permute.xlu0 %1852
  %1874 = vrot.lane.b32.xlu0 %v1772, 48
  %v1875 = vpop.permute.xlu0 %1874
  %1876 = vrot.lane.b32.xlu0 %v1773, 48
  %v1877 = vpop.permute.xlu0 %1876
  %1878 = vrot.lane.b32.xlu0 %v1774, 48
  %v1879 = vpop.permute.xlu0 %1878
  %1880 = vrot.lane.b32.xlu0 %v1775, 48
  %v1881 = vpop.permute.xlu0 %1880
  %1882 = vrot.lane.b32.xlu0 %v1778, 48
  %v1883 = vpop.permute.xlu0 %1882
  %1884 = vrot.lane.b32.xlu0 %v1779, 48
  %v1885 = vpop.permute.xlu0 %1884
  %1886 = vrot.lane.b32.xlu0 %v1780, 48
  %v1887 = vpop.permute.xlu0 %1886
  %1888 = vrot.lane.b32.xlu0 %v1781, 48
  %v1889 = vpop.permute.xlu0 %1888
  %1890 = vrot.lane.b32.xlu0 %v1784, 48
  %v1891 = vpop.permute.xlu0 %1890
  %1892 = vrot.lane.b32.xlu0 %v1785, 48
  %v1893 = vpop.permute.xlu0 %1892
  %1894 = vrot.lane.b32.xlu0 %v1786, 48
  %v1895 = vpop.permute.xlu0 %1894
  %1896 = vrot.lane.b32.xlu0 %v1787, 48
  %v1897 = vpop.permute.xlu0 %1896
  %1898 = vrot.lane.b32.xlu0 %v1790, 48
  %v1899 = vpop.permute.xlu0 %1898
  %1900 = vrot.lane.b32.xlu0 %v1791, 48
  %v1901 = vpop.permute.xlu0 %1900
  %1902 = vrot.lane.b32.xlu0 %v1792, 48
  %v1903 = vpop.permute.xlu0 %1902
  %1904 = vrot.lane.b32.xlu0 %v1793, 48
  %v1905 = vpop.permute.xlu0 %1904
  %1929 = vrot.lane.b32.xlu0 %v1776, 72
  %v1930 = vpop.permute.xlu0 %1929
  %1931 = vrot.lane.b32.xlu0 %v1777, 72
  %v1932 = vpop.permute.xlu0 %1931
  %1933 = vrot.lane.b32.xlu0 %v1778, 72
  %v1934 = vpop.permute.xlu0 %1933
  %1935 = vrot.lane.b32.xlu0 %v1779, 72
  %v1936 = vpop.permute.xlu0 %1935
  %1937 = vrot.lane.b32.xlu0 %v1782, 72
  %v1938 = vpop.permute.xlu0 %1937
  %1939 = vrot.lane.b32.xlu0 %v1783, 72
  %v1940 = vpop.permute.xlu0 %1939
  %1941 = vrot.lane.b32.xlu0 %v1784, 72
  %v1942 = vpop.permute.xlu0 %1941
  %1943 = vrot.lane.b32.xlu0 %v1785, 72
  %v1944 = vpop.permute.xlu0 %1943
  %1945 = vrot.lane.b32.xlu0 %v1788, 72
  %v1946 = vpop.permute.xlu0 %1945
  %1947 = vrot.lane.b32.xlu0 %v1789, 72
  %v1948 = vpop.permute.xlu0 %1947
  %1949 = vrot.lane.b32.xlu0 %v1790, 72
  %v1950 = vpop.permute.xlu0 %1949
  %1951 = vrot.lane.b32.xlu0 %v1791, 72
  %v1952 = vpop.permute.xlu0 %1951
  %1953 = vrot.lane.b32.xlu0 %v1794, 72
  %v1954 = vpop.permute.xlu0 %1953
  %1955 = vrot.lane.b32.xlu0 %v1795, 72
  %v1956 = vpop.permute.xlu0 %1955
  %1957 = vrot.lane.b32.xlu0 %v1796, 72
  %v1958 = vpop.permute.xlu0 %1957
  %1959 = vrot.lane.b32.xlu0 %v1797, 72
  %v1960 = vpop.permute.xlu0 %1959
  %1978 = vrot.lane.b32.xlu0 %v1777, 96
  %v1979 = vpop.permute.xlu0 %1978
  %1980 = vrot.lane.b32.xlu0 %v1778, 96
  %v1981 = vpop.permute.xlu0 %1980
  %1982 = vrot.lane.b32.xlu0 %v1779, 96
  %v1983 = vpop.permute.xlu0 %1982
  %1984 = vrot.lane.b32.xlu0 %v1780, 96
  %v1985 = vpop.permute.xlu0 %1984
  %1986 = vrot.lane.b32.xlu0 %v1783, 96
  %v1987 = vpop.permute.xlu0 %1986
  %1988 = vrot.lane.b32.xlu0 %v1784, 96
  %v1989 = vpop.permute.xlu0 %1988
  %1990 = vrot.lane.b32.xlu0 %v1785, 96
  %v1991 = vpop.permute.xlu0 %1990
  %1992 = vrot.lane.b32.xlu0 %v1786, 96
  %v1993 = vpop.permute.xlu0 %1992
  %1994 = vrot.lane.b32.xlu0 %v1789, 96
  %v1995 = vpop.permute.xlu0 %1994
  %1996 = vrot.lane.b32.xlu0 %v1790, 96
  %v1997 = vpop.permute.xlu0 %1996
  %1998 = vrot.lane.b32.xlu0 %v1791, 96
  %v1999 = vpop.permute.xlu0 %1998
  %2000 = vrot.lane.b32.xlu0 %v1792, 96
  %v2001 = vpop.permute.xlu0 %2000
  %2002 = vrot.lane.b32.xlu0 %v1795, 96
  %v2003 = vpop.permute.xlu0 %2002
  %2004 = vrot.lane.b32.xlu0 %v1796, 96
  %v2005 = vpop.permute.xlu0 %2004
  %2006 = vrot.lane.b32.xlu0 %v1797, 96
  %v2007 = vpop.permute.xlu0 %2006
  %2008 = vrot.lane.b32.xlu0 %v1798, 96
  %v2009 = vpop.permute.xlu0 %2008
  %2027 = vrot.lane.b32.xlu0 %v1778, 120
  %v2028 = vpop.permute.xlu0 %2027
  %2029 = vrot.lane.b32.xlu0 %v1779, 120
  %v2030 = vpop.permute.xlu0 %2029
  %2031 = vrot.lane.b32.xlu0 %v1780, 120
  %v2032 = vpop.permute.xlu0 %2031
  %2033 = vrot.lane.b32.xlu0 %v1781, 120
  %v2034 = vpop.permute.xlu0 %2033
  %2035 = vrot.lane.b32.xlu0 %v1784, 120
  %v2036 = vpop.permute.xlu0 %2035
  %2037 = vrot.lane.b32.xlu0 %v1785, 120
  %v2038 = vpop.permute.xlu0 %2037
  %2039 = vrot.lane.b32.xlu0 %v1786, 120
  %v2040 = vpop.permute.xlu0 %2039
  %2041 = vrot.lane.b32.xlu0 %v1787, 120
  %v2042 = vpop.permute.xlu0 %2041
  %2043 = vrot.lane.b32.xlu0 %v1790, 120
  %v2044 = vpop.permute.xlu0 %2043
  %2045 = vrot.lane.b32.xlu0 %v1791, 120
  %v2046 = vpop.permute.xlu0 %2045
  %2047 = vrot.lane.b32.xlu0 %v1792, 120
  %v2048 = vpop.permute.xlu0 %2047
  %2049 = vrot.lane.b32.xlu0 %v1793, 120
  %v2050 = vpop.permute.xlu0 %2049
  %2051 = vrot.lane.b32.xlu0 %v1796, 120
  %v2052 = vpop.permute.xlu0 %2051
  %2053 = vrot.lane.b32.xlu0 %v1797, 120
  %v2054 = vpop.permute.xlu0 %2053
  %2055 = vrot.lane.b32.xlu0 %v1798, 120
  %v2056 = vpop.permute.xlu0 %2055
  %2057 = vrot.lane.b32.xlu0 %v1799, 120
  %v2058 = vpop.permute.xlu0 %2057
  %2079 = vrot.lane.b32.xlu0 %v1782, 16
  %v2080 = vpop.permute.xlu0 %2079
  %2081 = vrot.lane.b32.xlu0 %v1783, 16
  %v2082 = vpop.permute.xlu0 %2081
  %2083 = vrot.lane.b32.xlu0 %v1784, 16
  %v2084 = vpop.permute.xlu0 %2083
  %2085 = vrot.lane.b32.xlu0 %v1785, 16
  %v2086 = vpop.permute.xlu0 %2085
  %2087 = vrot.lane.b32.xlu0 %v1788, 16
  %v2088 = vpop.permute.xlu0 %2087
  %2089 = vrot.lane.b32.xlu0 %v1789, 16
  %v2090 = vpop.permute.xlu0 %2089
  %2091 = vrot.lane.b32.xlu0 %v1790, 16
  %v2092 = vpop.permute.xlu0 %2091
  %2093 = vrot.lane.b32.xlu0 %v1791, 16
  %v2094 = vpop.permute.xlu0 %2093
  %2095 = vrot.lane.b32.xlu0 %v1794, 16
  %v2096 = vpop.permute.xlu0 %2095
  %2097 = vrot.lane.b32.xlu0 %v1795, 16
  %v2098 = vpop.permute.xlu0 %2097
  %2099 = vrot.lane.b32.xlu0 %v1796, 16
  %v2100 = vpop.permute.xlu0 %2099
  %2101 = vrot.lane.b32.xlu0 %v1797, 16
  %v2102 = vpop.permute.xlu0 %2101
  %2103 = vrot.lane.b32.xlu0 %v1800, 16
  %v2104 = vpop.permute.xlu0 %2103
  %2105 = vrot.lane.b32.xlu0 %v1801, 16
  %v2106 = vpop.permute.xlu0 %2105
  %2107 = vrot.lane.b32.xlu0 %v1802, 16
  %v2108 = vpop.permute.xlu0 %2107
  %2109 = vrot.lane.b32.xlu0 %v1803, 16
  %v2110 = vpop.permute.xlu0 %2109
  %2128 = vrot.lane.b32.xlu0 %v1783, 40
  %v2129 = vpop.permute.xlu0 %2128
  %2130 = vrot.lane.b32.xlu0 %v1784, 40
  %v2131 = vpop.permute.xlu0 %2130
  %2132 = vrot.lane.b32.xlu0 %v1785, 40
  %v2133 = vpop.permute.xlu0 %2132
  %2134 = vrot.lane.b32.xlu0 %v1786, 40
  %v2135 = vpop.permute.xlu0 %2134
  %2136 = vrot.lane.b32.xlu0 %v1789, 40
  %v2137 = vpop.permute.xlu0 %2136
  %2138 = vrot.lane.b32.xlu0 %v1790, 40
  %v2139 = vpop.permute.xlu0 %2138
  %2140 = vrot.lane.b32.xlu0 %v1791, 40
  %v2141 = vpop.permute.xlu0 %2140
  %2142 = vrot.lane.b32.xlu0 %v1792, 40
  %v2143 = vpop.permute.xlu0 %2142
  %2144 = vrot.lane.b32.xlu0 %v1795, 40
  %v2145 = vpop.permute.xlu0 %2144
  %2146 = vrot.lane.b32.xlu0 %v1796, 40
  %v2147 = vpop.permute.xlu0 %2146
  %2148 = vrot.lane.b32.xlu0 %v1797, 40
  %v2149 = vpop.permute.xlu0 %2148
  %2150 = vrot.lane.b32.xlu0 %v1798, 40
  %v2151 = vpop.permute.xlu0 %2150
  %2152 = vrot.lane.b32.xlu0 %v1801, 40
  %v2153 = vpop.permute.xlu0 %2152
  %2154 = vrot.lane.b32.xlu0 %v1802, 40
  %v2155 = vpop.permute.xlu0 %2154
  %2156 = vrot.lane.b32.xlu0 %v1803, 40
  %v2157 = vpop.permute.xlu0 %2156
  %2158 = vrot.lane.b32.xlu0 %v1804, 40
  %v2159 = vpop.permute.xlu0 %2158
  %2177 = vrot.lane.b32.xlu0 %v1784, 64
  %v2178 = vpop.permute.xlu0 %2177
  %2179 = vrot.lane.b32.xlu0 %v1785, 64
  %v2180 = vpop.permute.xlu0 %2179
  %2181 = vrot.lane.b32.xlu0 %v1786, 64
  %v2182 = vpop.permute.xlu0 %2181
  %2183 = vrot.lane.b32.xlu0 %v1787, 64
  %v2184 = vpop.permute.xlu0 %2183
  %2185 = vrot.lane.b32.xlu0 %v1790, 64
  %v2186 = vpop.permute.xlu0 %2185
  %2187 = vrot.lane.b32.xlu0 %v1791, 64
  %v2188 = vpop.permute.xlu0 %2187
  %2189 = vrot.lane.b32.xlu0 %v1792, 64
  %v2190 = vpop.permute.xlu0 %2189
  %2191 = vrot.lane.b32.xlu0 %v1793, 64
  %v2192 = vpop.permute.xlu0 %2191
  %2193 = vrot.lane.b32.xlu0 %v1796, 64
  %v2194 = vpop.permute.xlu0 %2193
  %2195 = vrot.lane.b32.xlu0 %v1797, 64
  %v2196 = vpop.permute.xlu0 %2195
  %2197 = vrot.lane.b32.xlu0 %v1798, 64
  %v2198 = vpop.permute.xlu0 %2197
  %2199 = vrot.lane.b32.xlu0 %v1799, 64
  %v2200 = vpop.permute.xlu0 %2199
  %2201 = vrot.lane.b32.xlu0 %v1802, 64
  %v2202 = vpop.permute.xlu0 %2201
  %2203 = vrot.lane.b32.xlu0 %v1803, 64
  %v2204 = vpop.permute.xlu0 %2203
  %2205 = vrot.lane.b32.xlu0 %v1804, 64
  %v2206 = vpop.permute.xlu0 %2205
  %2207 = vrot.lane.b32.xlu0 %v1805, 64
  %v2208 = vpop.permute.xlu0 %2207
  %vm2225 = vcmask 195584
  %v2226 = vsel %vm2225, %v1770, %v1823
  %v2227 = vsel %vm2225, %v1771, %v1825
  %v2228 = vsel %vm2225, %v1772, %v1827
  %v2229 = vsel %vm2225, %v1773, %v1829
  %v2230 = vsel %vm2225, %v1776, %v1831
  %v2231 = vsel %vm2225, %v1777, %v1833
  %v2232 = vsel %vm2225, %v1778, %v1835
  %v2233 = vsel %vm2225, %v1779, %v1837
  %v2234 = vsel %vm2225, %v1782, %v1839
  %v2235 = vsel %vm2225, %v1783, %v1841
  %v2236 = vsel %vm2225, %v1784, %v1843
  %v2237 = vsel %vm2225, %v1785, %v1845
  %v2238 = vsel %vm2225, %v1788, %v1847
  %v2239 = vsel %vm2225, %v1789, %v1849
  %v2240 = vsel %vm2225, %v1790, %v1851
  %v2241 = vsel %vm2225, %v1791, %v1853
  %v2242 = vsel %vm533, %v2226, %v1875
  %v2243 = vsel %vm533, %v2227, %v1877
  %v2244 = vsel %vm533, %v2228, %v1879
  %v2245 = vsel %vm533, %v2229, %v1881
  %v2246 = vsel %vm533, %v2230, %v1883
  %v2247 = vsel %vm533, %v2231, %v1885
  %v2248 = vsel %vm533, %v2232, %v1887
  %v2249 = vsel %vm533, %v2233, %v1889
  %v2250 = vsel %vm533, %v2234, %v1891
  %v2251 = vsel %vm533, %v2235, %v1893
  %v2252 = vsel %vm533, %v2236, %v1895
  %v2253 = vsel %vm533, %v2237, %v1897
  %v2254 = vsel %vm533, %v2238, %v1899
  %v2255 = vsel %vm533, %v2239, %v1901
  %v2256 = vsel %vm533, %v2240, %v1903
  %v2257 = vsel %vm533, %v2241, %v1905
  %vm2258 = vcmask 588800
  %v2259 = vsel %vm2258, %v2242, %v1930
  %v2260 = vsel %vm2258, %v2243, %v1932
  %v2261 = vsel %vm2258, %v2244, %v1934
  %v2262 = vsel %vm2258, %v2245, %v1936
  %v2263 = vsel %vm2258, %v2246, %v1938
  %v2264 = vsel %vm2258, %v2247, %v1940
  %v2265 = vsel %vm2258, %v2248, %v1942
  %v2266 = vsel %vm2258, %v2249, %v1944
  %v2267 = vsel %vm2258, %v2250, %v1946
  %v2268 = vsel %vm2258, %v2251, %v1948
  %v2269 = vsel %vm2258, %v2252, %v1950
  %v2270 = vsel %vm2258, %v2253, %v1952
  %v2271 = vsel %vm2258, %v2254, %v1954
  %v2272 = vsel %vm2258, %v2255, %v1956
  %v2273 = vsel %vm2258, %v2256, %v1958
  %v2274 = vsel %vm2258, %v2257, %v1960
  %vm2275 = vcmask 785408
  %v2276 = vsel %vm2275, %v2259, %v1979
  %v2277 = vsel %vm2275, %v2260, %v1981
  %v2278 = vsel %vm2275, %v2261, %v1983
  %v2279 = vsel %vm2275, %v2262, %v1985
  %v2280 = vsel %vm2275, %v2263, %v1987
  %v2281 = vsel %vm2275, %v2264, %v1989
  %v2282 = vsel %vm2275, %v2265, %v1991
  %v2283 = vsel %vm2275, %v2266, %v1993
  %v2284 = vsel %vm2275, %v2267, %v1995
  %v2285 = vsel %vm2275, %v2268, %v1997
  %v2286 = vsel %vm2275, %v2269, %v1999
  %v2287 = vsel %vm2275, %v2270, %v2001
  %v2288 = vsel %vm2275, %v2271, %v2003
  %v2289 = vsel %vm2275, %v2272, %v2005
  %v2290 = vsel %vm2275, %v2273, %v2007
  %v2291 = vsel %vm2275, %v2274, %v2009
  %vm2292 = vcmask 982016
  %v2293 = vsel %vm2292, %v2276, %v2028
  %v2294 = vsel %vm2292, %v2277, %v2030
  %v2295 = vsel %vm2292, %v2278, %v2032
  %v2296 = vsel %vm2292, %v2279, %v2034
  %v2297 = vsel %vm2292, %v2280, %v2036
  %v2298 = vsel %vm2292, %v2281, %v2038
  %v2299 = vsel %vm2292, %v2282, %v2040
  %v2300 = vsel %vm2292, %v2283, %v2042
  %v2301 = vsel %vm2292, %v2284, %v2044
  %v2302 = vsel %vm2292, %v2285, %v2046
  %v2303 = vsel %vm2292, %v2286, %v2048
  %v2304 = vsel %vm2292, %v2287, %v2050
  %v2305 = vsel %vm2292, %v2288, %v2052
  %v2306 = vsel %vm2292, %v2289, %v2054
  %v2307 = vsel %vm2292, %v2290, %v2056
  %v2308 = vsel %vm2292, %v2291, %v2058
  %v2309 = vsel %vm459, %v2028, %v2080
  %v2310 = vsel %vm459, %v2030, %v2082
  %v2311 = vsel %vm459, %v2032, %v2084
  %v2312 = vsel %vm459, %v2034, %v2086
  %v2313 = vsel %vm459, %v2036, %v2088
  %v2314 = vsel %vm459, %v2038, %v2090
  %v2315 = vsel %vm459, %v2040, %v2092
  %v2316 = vsel %vm459, %v2042, %v2094
  %v2317 = vsel %vm459, %v2044, %v2096
  %v2318 = vsel %vm459, %v2046, %v2098
  %v2319 = vsel %vm459, %v2048, %v2100
  %v2320 = vsel %vm459, %v2050, %v2102
  %v2321 = vsel %vm459, %v2052, %v2104
  %v2322 = vsel %vm459, %v2054, %v2106
  %v2323 = vsel %vm459, %v2056, %v2108
  %v2324 = vsel %vm459, %v2058, %v2110
  %vm2325 = vcmask 326656
  %v2326 = vsel %vm2325, %v2309, %v2129
  %v2327 = vsel %vm2325, %v2310, %v2131
  %v2328 = vsel %vm2325, %v2311, %v2133
  %v2329 = vsel %vm2325, %v2312, %v2135
  %v2330 = vsel %vm2325, %v2313, %v2137
  %v2331 = vsel %vm2325, %v2314, %v2139
  %v2332 = vsel %vm2325, %v2315, %v2141
  %v2333 = vsel %vm2325, %v2316, %v2143
  %v2334 = vsel %vm2325, %v2317, %v2145
  %v2335 = vsel %vm2325, %v2318, %v2147
  %v2336 = vsel %vm2325, %v2319, %v2149
  %v2337 = vsel %vm2325, %v2320, %v2151
  %v2338 = vsel %vm2325, %v2321, %v2153
  %v2339 = vsel %vm2325, %v2322, %v2155
  %v2340 = vsel %vm2325, %v2323, %v2157
  %v2341 = vsel %vm2325, %v2324, %v2159
  %v2342 = vsel %vm585, %v2326, %v2178
  %v2343 = vsel %vm585, %v2327, %v2180
  %v2344 = vsel %vm585, %v2328, %v2182
  %v2345 = vsel %vm585, %v2329, %v2184
  %v2346 = vsel %vm585, %v2330, %v2186
  %v2347 = vsel %vm585, %v2331, %v2188
  %v2348 = vsel %vm585, %v2332, %v2190
  %v2349 = vsel %vm585, %v2333, %v2192
  %v2350 = vsel %vm585, %v2334, %v2194
  %v2351 = vsel %vm585, %v2335, %v2196
  %v2352 = vsel %vm585, %v2336, %v2198
  %v2353 = vsel %vm585, %v2337, %v2200
  %v2354 = vsel %vm585, %v2338, %v2202
  %v2355 = vsel %vm585, %v2339, %v2204
  %v2356 = vsel %vm585, %v2340, %v2206
  %v2357 = vsel %vm585, %v2341, %v2208
  %v2358 = vld [vmem:[%s3] sm:$0xff]
  %v2359 = vld [vmem:[%s3 + $0x8] sm:$0xff]
  %v2360 = vld [vmem:[%s3 + $0x10] sm:$0xff]
  %v2361 = vld [vmem:[%s3 + $0x18] sm:$0xff]
  %v2362 = vld [vmem:[%s3 + $0x20] sm:$0xff]
  %v2363 = vld [vmem:[%s3 + $0x28] sm:$0xff]
  %v2364 = vld [vmem:[%s3 + $0x30] sm:$0xff]
  %v2365 = vld [vmem:[%s3 + $0x38] sm:$0xff]
  %v2366 = vld [vmem:[%s3 + $0x40] sm:$0xff]
  %v2367 = vld [vmem:[%s3 + $0x48] sm:$0xff]
  %v2368 = vld [vmem:[%s3 + $0x50] sm:$0xff]
  %v2369 = vld [vmem:[%s3 + $0x58] sm:$0xff]
  %v2370 = vld [vmem:[%s3 + $0x60] sm:$0xff]
  %v2371 = vld [vmem:[%s3 + $0x68] sm:$0xff]
  %v2372 = vld [vmem:[%s3 + $0x70] sm:$0xff]
  %v2373 = vld [vmem:[%s3 + $0x78] sm:$0xff]
  %v2374 = vld [vmem:[%s3 + $0x80] sm:$0xff]
  %v2375 = vld [vmem:[%s3 + $0x88] sm:$0xff]
  %v2376 = vld [vmem:[%s3 + $0x90] sm:$0xff]
  %v2377 = vld [vmem:[%s3 + $0x98] sm:$0xff]
  %v2378 = vld [vmem:[%s3 + $0xa0] sm:$0xff]
  %v2379 = vld [vmem:[%s3 + $0xa8] sm:$0xff]
  %v2380 = vld [vmem:[%s3 + $0xb0] sm:$0xff]
  %v2381 = vld [vmem:[%s3 + $0xb8] sm:$0xff]
  %v2382 = vld [vmem:[%s3 + $0xc0] sm:$0xff]
  %v2383 = vld [vmem:[%s3 + $0xc8] sm:$0xff]
  %v2384 = vld [vmem:[%s3 + $0xd0] sm:$0xff]
  %v2385 = vld [vmem:[%s4] sm:$0x1]
  %v2387 = vlaneseq
  %v2388 = vshrl.u32 %v2387, 7
  %v2389 = vsub.s32 0, %v2388
  %v2390 = vrot.slane %v2385, %v2389
  %vm2392 = vcmask 719872
  %v2394 = vsel %vm2392, %v2342, 0
  %v2397 = vsel %vm2392, %v2343, 0
  %v2400 = vsel %vm2392, %v2344, 0
  %v2403 = vsel %vm2392, %v2345, 0
  %v2406 = vsel %vm2392, %v2346, 0
  %v2409 = vsel %vm2392, %v2347, 0
  %v2412 = vsel %vm2392, %v2348, 0
  %v2415 = vsel %vm2392, %v2349, 0
  %v2418 = vsel %vm2392, %v2350, 0
  %v2421 = vsel %vm2392, %v2351, 0
  %v2424 = vsel %vm2392, %v2352, 0
  %v2427 = vsel %vm2392, %v2353, 0
  %v2430 = vsel %vm2392, %v2354, 0
  %v2433 = vsel %vm2392, %v2355, 0
  %v2436 = vsel %vm2392, %v2356, 0
  %v2439 = vsel %vm2392, %v2357, 0
  %2441 = vmatprep.subr.mxu0 0.0
  %2442 = vmatpush1.msra.mxu0 %v2373
  %2443 = vmatprep.subr.mxu0 0.0
  %2444 = vmatpush1.msra.mxu0 %v2372
  %2445 = vmatprep.subr.mxu0 0.0
  %2446 = vmatpush1.msra.mxu0 %v2371
  %2447 = vmatprep.subr.mxu0 0.0
  %2448 = vmatpush1.msra.mxu0 %v2370
  %2449 = vmatprep.subr.mxu0 0.0
  %2450 = vmatpush1.msra.mxu0 %v2369
  %2451 = vmatprep.subr.mxu0 0.0
  %2452 = vmatpush1.msra.mxu0 %v2368
  %2453 = vmatprep.subr.mxu0 0.0
  %2454 = vmatpush1.msra.mxu0 %v2367
  %2455 = vmatprep.subr.mxu0 0.0
  %2456 = vmatpush1.msra.mxu0 %v2366
  %2457 = vmatprep.subr.mxu0 0.0
  %2458 = vmatpush1.msra.mxu0 %v2365
  %2459 = vmatprep.subr.mxu0 0.0
  %2460 = vmatpush1.msra.mxu0 %v2364
  %2461 = vmatprep.subr.mxu0 0.0
  %2462 = vmatpush1.msra.mxu0 %v2363
  %2463 = vmatprep.subr.mxu0 0.0
  %2464 = vmatpush1.msra.mxu0 %v2362
  %2465 = vmatprep.subr.mxu0 0.0
  %2466 = vmatpush1.msra.mxu0 %v2361
  %2467 = vmatprep.subr.mxu0 0.0
  %2468 = vmatpush1.msra.mxu0 %v2360
  %2469 = vmatprep.subr.mxu0 0.0
  %2470 = vmatpush1.msra.mxu0 %v2359
  %2471 = vmatprep.subr.mxu0 0.0
  %2472 = vmatpush1.msra.mxu0 %v2358
  %2473 = vmatprep.subr.mxu0 0.0
  %2474 = vmatpush2.msra.mxu0 0.0
  %2475 = vmatprep.subr.mxu0 0.0
  %2476 = vmatpush2.msra.mxu0 0.0
  %2477 = vmatprep.subr.mxu0 0.0
  %2478 = vmatpush2.msra.mxu0 0.0
  %2479 = vmatprep.subr.mxu0 0.0
  %2480 = vmatpush2.msra.mxu0 0.0
  %2481 = vmatprep.subr.mxu0 0.0
  %2482 = vmatpush2.msra.mxu0 0.0
  %2483 = vmatprep.subr.mxu0 0.0
  %2484 = vmatpush2.msra.mxu0 %v2384
  %2485 = vmatprep.subr.mxu0 0.0
  %2486 = vmatpush2.msra.mxu0 %v2383
  %2487 = vmatprep.subr.mxu0 0.0
  %2488 = vmatpush2.msra.mxu0 %v2382
  %2489 = vmatprep.subr.mxu0 0.0
  %2490 = vmatpush2.msra.mxu0 %v2381
  %2491 = vmatprep.subr.mxu0 0.0
  %2492 = vmatpush2.msra.mxu0 %v2380
  %2493 = vmatprep.subr.mxu0 0.0
  %2494 = vmatpush2.msra.mxu0 %v2379
  %2495 = vmatprep.subr.mxu0 0.0
  %2496 = vmatpush2.msra.mxu0 %v2378
  %2497 = vmatprep.subr.mxu0 0.0
  %2498 = vmatpush2.msra.mxu0 %v2377
  %2499 = vmatprep.subr.mxu0 0.0
  %2500 = vmatpush2.msra.mxu0 %v2376
  %2501 = vmatprep.subr.mxu0 0.0
  %2502 = vmatpush2.msra.mxu0 %v2375
  %2503 = vmatprep.subr.mxu0 0.0
  %2504 = vmatpush2.msra.mxu0 %v2374
  %2505 = vmatprep.mubr.f32.mxu0 %v2394
  %2506 = vmatmul.mubr.f32.gmra.mxu0 %v2293
  %v2507 = vpop.f32.mrf.mxu0
  %v2508 = vadd.f32 %v2390, %v2507
  %v2509 = vpop.f32.mrf.mxu0
  %2510 = vmatprep.mubr.f32.mxu0 %v2397
  %2511 = vmatmul.mubr.f32.gmra.mxu0 %v2294
  %v2512 = vpop.f32.mrf.mxu0
  %v2513 = vadd.f32 %v2390, %v2512
  %v2514 = vpop.f32.mrf.mxu0
  %2515 = vmatprep.mubr.f32.mxu0 %v2400
  %2516 = vmatmul.mubr.f32.gmra.mxu0 %v2295
  %v2517 = vpop.f32.mrf.mxu0
  %v2518 = vadd.f32 %v2390, %v2517
  %v2519 = vpop.f32.mrf.mxu0
  %2520 = vmatprep.mubr.f32.mxu0 %v2403
  %2521 = vmatmul.mubr.f32.gmra.mxu0 %v2296
  %v2522 = vpop.f32.mrf.mxu0
  %v2523 = vadd.f32 %v2390, %v2522
  %v2524 = vpop.f32.mrf.mxu0
  %2525 = vmatprep.mubr.f32.mxu0 %v2406
  %2526 = vmatmul.mubr.f32.gmra.mxu0 %v2297
  %v2527 = vpop.f32.mrf.mxu0
  %v2528 = vadd.f32 %v2390, %v2527
  %v2529 = vpop.f32.mrf.mxu0
  %2530 = vmatprep.mubr.f32.mxu0 %v2409
  %2531 = vmatmul.mubr.f32.gmra.mxu0 %v2298
  %v2532 = vpop.f32.mrf.mxu0
  %v2533 = vadd.f32 %v2390, %v2532
  %v2534 = vpop.f32.mrf.mxu0
  %2535 = vmatprep.mubr.f32.mxu0 %v2412
  %2536 = vmatmul.mubr.f32.gmra.mxu0 %v2299
  %v2537 = vpop.f32.mrf.mxu0
  %v2538 = vadd.f32 %v2390, %v2537
  %v2539 = vpop.f32.mrf.mxu0
  %2540 = vmatprep.mubr.f32.mxu0 %v2415
  %2541 = vmatmul.mubr.f32.gmra.mxu0 %v2300
  %v2542 = vpop.f32.mrf.mxu0
  %v2543 = vadd.f32 %v2390, %v2542
  %v2544 = vpop.f32.mrf.mxu0
  %2545 = vmatprep.mubr.f32.mxu0 %v2418
  %2546 = vmatmul.mubr.f32.gmra.mxu0 %v2301
  %v2547 = vpop.f32.mrf.mxu0
  %v2548 = vadd.f32 %v2390, %v2547
  %v2549 = vpop.f32.mrf.mxu0
  %2550 = vmatprep.mubr.f32.mxu0 %v2421
  %2551 = vmatmul.mubr.f32.gmra.mxu0 %v2302
  %v2552 = vpop.f32.mrf.mxu0
  %v2553 = vadd.f32 %v2390, %v2552
  %v2554 = vpop.f32.mrf.mxu0
  %2555 = vmatprep.mubr.f32.mxu0 %v2424
  %2556 = vmatmul.mubr.f32.gmra.mxu0 %v2303
  %v2557 = vpop.f32.mrf.mxu0
  %v2558 = vadd.f32 %v2390, %v2557
  %v2559 = vpop.f32.mrf.mxu0
  %2560 = vmatprep.mubr.f32.mxu0 %v2427
  %2561 = vmatmul.mubr.f32.gmra.mxu0 %v2304
  %v2562 = vpop.f32.mrf.mxu0
  %v2563 = vadd.f32 %v2390, %v2562
  %v2564 = vpop.f32.mrf.mxu0
  %2565 = vmatprep.mubr.f32.mxu0 %v2430
  %2566 = vmatmul.mubr.f32.gmra.mxu0 %v2305
  %v2567 = vpop.f32.mrf.mxu0
  %v2568 = vadd.f32 %v2390, %v2567
  %v2569 = vpop.f32.mrf.mxu0
  %2570 = vmatprep.mubr.f32.mxu0 %v2433
  %2571 = vmatmul.mubr.f32.gmra.mxu0 %v2306
  %v2572 = vpop.f32.mrf.mxu0
  %v2573 = vadd.f32 %v2390, %v2572
  %v2574 = vpop.f32.mrf.mxu0
  %2575 = vmatprep.mubr.f32.mxu0 %v2436
  %2576 = vmatmul.mubr.f32.gmra.mxu0 %v2307
  %v2577 = vpop.f32.mrf.mxu0
  %v2578 = vadd.f32 %v2390, %v2577
  %v2579 = vpop.f32.mrf.mxu0
  %2580 = vmatprep.mubr.f32.mxu0 %v2439
  %2581 = vmatmul.mubr.f32.gmra.mxu0 %v2308
  %v2582 = vpop.f32.mrf.mxu0
  %v2583 = vadd.f32 %v2390, %v2582
  %v2584 = vpop.f32.mrf.mxu0
  %2585 = vdwg.mxu0
  %2602 = vrot.lane.b32.xlu0 %v2508, 112
  %v2603 = vpop.permute.xlu0 %2602
  %2604 = vrot.lane.b32.xlu0 %v2513, 112
  %v2605 = vpop.permute.xlu0 %2604
  %2606 = vrot.lane.b32.xlu0 %v2518, 112
  %v2607 = vpop.permute.xlu0 %2606
  %2608 = vrot.lane.b32.xlu0 %v2523, 112
  %v2609 = vpop.permute.xlu0 %2608
  %2610 = vrot.lane.b32.xlu0 %v2528, 112
  %v2611 = vpop.permute.xlu0 %2610
  %2612 = vrot.lane.b32.xlu0 %v2533, 112
  %v2613 = vpop.permute.xlu0 %2612
  %2614 = vrot.lane.b32.xlu0 %v2538, 112
  %v2615 = vpop.permute.xlu0 %2614
  %2616 = vrot.lane.b32.xlu0 %v2543, 112
  %v2617 = vpop.permute.xlu0 %2616
  %2618 = vrot.lane.b32.xlu0 %v2548, 112
  %v2619 = vpop.permute.xlu0 %2618
  %2620 = vrot.lane.b32.xlu0 %v2553, 112
  %v2621 = vpop.permute.xlu0 %2620
  %2622 = vrot.lane.b32.xlu0 %v2558, 112
  %v2623 = vpop.permute.xlu0 %2622
  %2624 = vrot.lane.b32.xlu0 %v2563, 112
  %v2625 = vpop.permute.xlu0 %2624
  %2626 = vrot.lane.b32.xlu0 %v2568, 112
  %v2627 = vpop.permute.xlu0 %2626
  %2628 = vrot.lane.b32.xlu0 %v2573, 112
  %v2629 = vpop.permute.xlu0 %2628
  %2630 = vrot.lane.b32.xlu0 %v2578, 112
  %v2631 = vpop.permute.xlu0 %2630
  %2632 = vrot.lane.b32.xlu0 %v2583, 112
  %v2633 = vpop.permute.xlu0 %2632
  %v2650 = vmax.f32 %v2508, %v2603
  %v2651 = vmax.f32 %v2513, %v2605
  %v2652 = vmax.f32 %v2518, %v2607
  %v2653 = vmax.f32 %v2523, %v2609
  %v2654 = vmax.f32 %v2528, %v2611
  %v2655 = vmax.f32 %v2533, %v2613
  %v2656 = vmax.f32 %v2538, %v2615
  %v2657 = vmax.f32 %v2543, %v2617
  %v2658 = vmax.f32 %v2548, %v2619
  %v2659 = vmax.f32 %v2553, %v2621
  %v2660 = vmax.f32 %v2558, %v2623
  %v2661 = vmax.f32 %v2563, %v2625
  %v2662 = vmax.f32 %v2568, %v2627
  %v2663 = vmax.f32 %v2573, %v2629
  %v2664 = vmax.f32 %v2578, %v2631
  %v2665 = vmax.f32 %v2583, %v2633
  %2682 = vrot.lane.b32.xlu0 %v2650, 96
  %v2683 = vpop.permute.xlu0 %2682
  %2684 = vrot.lane.b32.xlu0 %v2651, 96
  %v2685 = vpop.permute.xlu0 %2684
  %2686 = vrot.lane.b32.xlu0 %v2652, 96
  %v2687 = vpop.permute.xlu0 %2686
  %2688 = vrot.lane.b32.xlu0 %v2653, 96
  %v2689 = vpop.permute.xlu0 %2688
  %2690 = vrot.lane.b32.xlu0 %v2654, 96
  %v2691 = vpop.permute.xlu0 %2690
  %2692 = vrot.lane.b32.xlu0 %v2655, 96
  %v2693 = vpop.permute.xlu0 %2692
  %2694 = vrot.lane.b32.xlu0 %v2656, 96
  %v2695 = vpop.permute.xlu0 %2694
  %2696 = vrot.lane.b32.xlu0 %v2657, 96
  %v2697 = vpop.permute.xlu0 %2696
  %2698 = vrot.lane.b32.xlu0 %v2658, 96
  %v2699 = vpop.permute.xlu0 %2698
  %2700 = vrot.lane.b32.xlu0 %v2659, 96
  %v2701 = vpop.permute.xlu0 %2700
  %2702 = vrot.lane.b32.xlu0 %v2660, 96
  %v2703 = vpop.permute.xlu0 %2702
  %2704 = vrot.lane.b32.xlu0 %v2661, 96
  %v2705 = vpop.permute.xlu0 %2704
  %2706 = vrot.lane.b32.xlu0 %v2662, 96
  %v2707 = vpop.permute.xlu0 %2706
  %2708 = vrot.lane.b32.xlu0 %v2663, 96
  %v2709 = vpop.permute.xlu0 %2708
  %2710 = vrot.lane.b32.xlu0 %v2664, 96
  %v2711 = vpop.permute.xlu0 %2710
  %2712 = vrot.lane.b32.xlu0 %v2665, 96
  %v2713 = vpop.permute.xlu0 %2712
  %v2730 = vmax.f32 %v2650, %v2683
  %v2731 = vmax.f32 %v2651, %v2685
  %v2732 = vmax.f32 %v2652, %v2687
  %v2733 = vmax.f32 %v2653, %v2689
  %v2734 = vmax.f32 %v2654, %v2691
  %v2735 = vmax.f32 %v2655, %v2693
  %v2736 = vmax.f32 %v2656, %v2695
  %v2737 = vmax.f32 %v2657, %v2697
  %v2738 = vmax.f32 %v2658, %v2699
  %v2739 = vmax.f32 %v2659, %v2701
  %v2740 = vmax.f32 %v2660, %v2703
  %v2741 = vmax.f32 %v2661, %v2705
  %v2742 = vmax.f32 %v2662, %v2707
  %v2743 = vmax.f32 %v2663, %v2709
  %v2744 = vmax.f32 %v2664, %v2711
  %v2745 = vmax.f32 %v2665, %v2713
  %v2746 = vmax.f32 %v2730, 0.0
  %v2747 = vmax.f32 %v2731, 0.0
  %v2748 = vmax.f32 %v2732, 0.0
  %v2749 = vmax.f32 %v2733, 0.0
  %v2750 = vmax.f32 %v2734, 0.0
  %v2751 = vmax.f32 %v2735, 0.0
  %v2752 = vmax.f32 %v2736, 0.0
  %v2753 = vmax.f32 %v2737, 0.0
  %v2754 = vmax.f32 %v2738, 0.0
  %v2755 = vmax.f32 %v2739, 0.0
  %v2756 = vmax.f32 %v2740, 0.0
  %v2757 = vmax.f32 %v2741, 0.0
  %v2758 = vmax.f32 %v2742, 0.0
  %v2759 = vmax.f32 %v2743, 0.0
  %v2760 = vmax.f32 %v2744, 0.0
  %v2761 = vmax.f32 %v2745, 0.0
  %2763 = vrot.lane.b32.xlu0 %v2747, 16
  %v2764 = vpop.permute.xlu0 %2763
  %2767 = vrot.lane.b32.xlu0 %v2748, 32
  %v2768 = vpop.permute.xlu0 %2767
  %2771 = vrot.lane.b32.xlu0 %v2749, 48
  %v2772 = vpop.permute.xlu0 %2771
  %2775 = vrot.lane.b32.xlu0 %v2750, 64
  %v2776 = vpop.permute.xlu0 %2775
  %2779 = vrot.lane.b32.xlu0 %v2751, 80
  %v2780 = vpop.permute.xlu0 %2779
  %2783 = vrot.lane.b32.xlu0 %v2752, 96
  %v2784 = vpop.permute.xlu0 %2783
  %2787 = vrot.lane.b32.xlu0 %v2753, 112
  %v2788 = vpop.permute.xlu0 %2787
  %2791 = vrot.lane.b32.xlu0 %v2755, 16
  %v2792 = vpop.permute.xlu0 %2791
  %2795 = vrot.lane.b32.xlu0 %v2756, 32
  %v2796 = vpop.permute.xlu0 %2795
  %2799 = vrot.lane.b32.xlu0 %v2757, 48
  %v2800 = vpop.permute.xlu0 %2799
  %2803 = vrot.lane.b32.xlu0 %v2758, 64
  %v2804 = vpop.permute.xlu0 %2803
  %2807 = vrot.lane.b32.xlu0 %v2759, 80
  %v2808 = vpop.permute.xlu0 %2807
  %2811 = vrot.lane.b32.xlu0 %v2760, 96
  %v2812 = vpop.permute.xlu0 %2811
  %2815 = vrot.lane.b32.xlu0 %v2761, 112
  %v2816 = vpop.permute.xlu0 %2815
  %v2818 = vsel %vm459, %v2746, %v2764
  %v2819 = vsel %vm496, %v2818, %v2768
  %v2820 = vsel %vm533, %v2819, %v2772
  %v2821 = vsel %vm585, %v2820, %v2776
  %vm2822 = vcmask 654336
  %v2823 = vsel %vm2822, %v2821, %v2780
  %v2824 = vsel %vm2275, %v2823, %v2784
  %vm2825 = vcmask 916480
  %v2826 = vsel %vm2825, %v2824, %v2788
  %v2827 = vsel %vm459, %v2754, %v2792
  %v2828 = vsel %vm496, %v2827, %v2796
  %v2829 = vsel %vm533, %v2828, %v2800
  %v2830 = vsel %vm585, %v2829, %v2804
  %v2831 = vsel %vm2822, %v2830, %v2808
  %v2832 = vsel %vm2275, %v2831, %v2812
  %v2833 = vsel %vm2825, %v2832, %v2816
  %v2834 = vld [vmem:[%s5] sm:$0xff]
  %v2835 = vld [vmem:[%s5 + $0x8] sm:$0xff]
  %v2836 = vld [vmem:[%s5 + $0x10] sm:$0xff]
  %v2837 = vld [vmem:[%s5 + $0x18] sm:$0xff]
  %v2838 = vld [vmem:[%s5 + $0x20] sm:$0xff]
  %v2839 = vld [vmem:[%s5 + $0x28] sm:$0xff]
  %v2840 = vld [vmem:[%s5 + $0x30] sm:$0xff]
  %v2841 = vld [vmem:[%s5 + $0x38] sm:$0xff]
  %v2842 = vld [vmem:[%s5 + $0x40] sm:$0xff]
  %v2843 = vld [vmem:[%s5 + $0x48] sm:$0xff]
  %v2844 = vld [vmem:[%s5 + $0x50] sm:$0xff]
  %v2845 = vld [vmem:[%s5 + $0x58] sm:$0xff]
  %v2846 = vld [vmem:[%s5 + $0x60] sm:$0xff]
  %v2847 = vld [vmem:[%s5 + $0x68] sm:$0xff]
  %v2848 = vld [vmem:[%s5 + $0x70] sm:$0xff]
  %v2849 = vld [vmem:[%s5 + $0x78] sm:$0xff]
  %v2850 = vld [vmem:[%s5 + $0x80] sm:$0xff]
  %v2851 = vld [vmem:[%s5 + $0x88] sm:$0xff]
  %v2852 = vld [vmem:[%s5 + $0x90] sm:$0xff]
  %v2853 = vld [vmem:[%s5 + $0x98] sm:$0xff]
  %v2854 = vld [vmem:[%s5 + $0xa0] sm:$0xff]
  %v2855 = vld [vmem:[%s5 + $0xa8] sm:$0xff]
  %v2856 = vld [vmem:[%s5 + $0xb0] sm:$0xff]
  %v2857 = vld [vmem:[%s5 + $0xb8] sm:$0xff]
  %v2858 = vld [vmem:[%s5 + $0xc0] sm:$0xff]
  %v2859 = vld [vmem:[%s5 + $0xc8] sm:$0xff]
  %v2860 = vld [vmem:[%s5 + $0xd0] sm:$0xff]
  %v2861 = vld [vmem:[%s5 + $0xd8] sm:$0xff]
  %v2862 = vld [vmem:[%s5 + $0xe0] sm:$0xff]
  %v2863 = vld [vmem:[%s5 + $0xe8] sm:$0xff]
  %v2864 = vld [vmem:[%s5 + $0xf0] sm:$0xff]
  %v2865 = vld [vmem:[%s5 + $0xf8] sm:$0xff]
  %v2866 = vld [vmem:[%s6] sm:$0x1]
  %v2868 = vlaneseq
  %v2869 = vshrl.u32 %v2868, 7
  %v2870 = vsub.s32 0, %v2869
  %v2871 = vrot.slane %v2866, %v2870
  %2873 = vmatprep.subr.mxu0 0.0
  %2874 = vmatpush1.msra.mxu0 %v2849
  %2875 = vmatprep.subr.mxu0 0.0
  %2876 = vmatpush1.msra.mxu0 %v2848
  %2877 = vmatprep.subr.mxu0 0.0
  %2878 = vmatpush1.msra.mxu0 %v2847
  %2879 = vmatprep.subr.mxu0 0.0
  %2880 = vmatpush1.msra.mxu0 %v2846
  %2881 = vmatprep.subr.mxu0 0.0
  %2882 = vmatpush1.msra.mxu0 %v2845
  %2883 = vmatprep.subr.mxu0 0.0
  %2884 = vmatpush1.msra.mxu0 %v2844
  %2885 = vmatprep.subr.mxu0 0.0
  %2886 = vmatpush1.msra.mxu0 %v2843
  %2887 = vmatprep.subr.mxu0 0.0
  %2888 = vmatpush1.msra.mxu0 %v2842
  %2889 = vmatprep.subr.mxu0 0.0
  %2890 = vmatpush1.msra.mxu0 %v2841
  %2891 = vmatprep.subr.mxu0 0.0
  %2892 = vmatpush1.msra.mxu0 %v2840
  %2893 = vmatprep.subr.mxu0 0.0
  %2894 = vmatpush1.msra.mxu0 %v2839
  %2895 = vmatprep.subr.mxu0 0.0
  %2896 = vmatpush1.msra.mxu0 %v2838
  %2897 = vmatprep.subr.mxu0 0.0
  %2898 = vmatpush1.msra.mxu0 %v2837
  %2899 = vmatprep.subr.mxu0 0.0
  %2900 = vmatpush1.msra.mxu0 %v2836
  %2901 = vmatprep.subr.mxu0 0.0
  %2902 = vmatpush1.msra.mxu0 %v2835
  %2903 = vmatprep.subr.mxu0 0.0
  %2904 = vmatpush1.msra.mxu0 %v2834
  %2905 = vmatprep.subr.mxu0 0.0
  %2906 = vmatpush2.msra.mxu0 %v2865
  %2907 = vmatprep.subr.mxu0 0.0
  %2908 = vmatpush2.msra.mxu0 %v2864
  %2909 = vmatprep.subr.mxu0 0.0
  %2910 = vmatpush2.msra.mxu0 %v2863
  %2911 = vmatprep.subr.mxu0 0.0
  %2912 = vmatpush2.msra.mxu0 %v2862
  %2913 = vmatprep.subr.mxu0 0.0
  %2914 = vmatpush2.msra.mxu0 %v2861
  %2915 = vmatprep.subr.mxu0 0.0
  %2916 = vmatpush2.msra.mxu0 %v2860
  %2917 = vmatprep.subr.mxu0 0.0
  %2918 = vmatpush2.msra.mxu0 %v2859
  %2919 = vmatprep.subr.mxu0 0.0
  %2920 = vmatpush2.msra.mxu0 %v2858
  %2921 = vmatprep.subr.mxu0 0.0
  %2922 = vmatpush2.msra.mxu0 %v2857
  %2923 = vmatprep.subr.mxu0 0.0
  %2924 = vmatpush2.msra.mxu0 %v2856
  %2925 = vmatprep.subr.mxu0 0.0
  %2926 = vmatpush2.msra.mxu0 %v2855
  %2927 = vmatprep.subr.mxu0 0.0
  %2928 = vmatpush2.msra.mxu0 %v2854
  %2929 = vmatprep.subr.mxu0 0.0
  %2930 = vmatpush2.msra.mxu0 %v2853
  %2931 = vmatprep.subr.mxu0 0.0
  %2932 = vmatpush2.msra.mxu0 %v2852
  %2933 = vmatprep.subr.mxu0 0.0
  %2934 = vmatpush2.msra.mxu0 %v2851
  %2935 = vmatprep.subr.mxu0 0.0
  %2936 = vmatpush2.msra.mxu0 %v2850
  %2937 = vmatprep.mubr.f32.mxu0 %v2833
  %2938 = vmatmul.mubr.f32.gmra.mxu0 %v2826
  %v2939 = vpop.f32.mrf.mxu0
  %v2940 = vadd.f32 %v2871, %v2939
  %v2941 = vpop.f32.mrf.mxu0
  %2942 = vdwg.mxu0
  %v2943 = vmax.f32 %v2940, 0.0
  %v2944 = vld [vmem:[%s7] sm:$0xff]
  %v2945 = vld [vmem:[%s7 + $0x8] sm:$0xff]
  %v2946 = vld [vmem:[%s7 + $0x10] sm:$0xff]
  %v2947 = vld [vmem:[%s7 + $0x18] sm:$0xff]
  %v2948 = vld [vmem:[%s7 + $0x20] sm:$0xff]
  %v2949 = vld [vmem:[%s7 + $0x28] sm:$0xff]
  %v2950 = vld [vmem:[%s7 + $0x30] sm:$0xff]
  %v2951 = vld [vmem:[%s7 + $0x38] sm:$0xff]
  %v2952 = vld [vmem:[%s7 + $0x40] sm:$0xff]
  %v2953 = vld [vmem:[%s7 + $0x48] sm:$0xff]
  %v2954 = vld [vmem:[%s7 + $0x50] sm:$0xff]
  %v2955 = vld [vmem:[%s7 + $0x58] sm:$0xff]
  %v2956 = vld [vmem:[%s7 + $0x60] sm:$0xff]
  %v2957 = vld [vmem:[%s7 + $0x68] sm:$0xff]
  %v2958 = vld [vmem:[%s7 + $0x70] sm:$0xff]
  %v2959 = vld [vmem:[%s8] sm:$0x1]
  %v2961 = vlaneseq
  %v2962 = vshrl.u32 %v2961, 7
  %v2963 = vsub.s32 0, %v2962
  %v2964 = vrot.slane %v2959, %v2963
  %v2967 = vsel %vm2292, %v2943, 0
  %2969 = vmatprep.subr.mxu0 0.0
  %2970 = vmatpush1.msra.mxu0 0.0
  %2971 = vmatprep.subr.mxu0 0.0
  %2972 = vmatpush1.msra.mxu0 %v2958
  %2973 = vmatprep.subr.mxu0 0.0
  %2974 = vmatpush1.msra.mxu0 %v2957
  %2975 = vmatprep.subr.mxu0 0.0
  %2976 = vmatpush1.msra.mxu0 %v2956
  %2977 = vmatprep.subr.mxu0 0.0
  %2978 = vmatpush1.msra.mxu0 %v2955
  %2979 = vmatprep.subr.mxu0 0.0
  %2980 = vmatpush1.msra.mxu0 %v2954
  %2981 = vmatprep.subr.mxu0 0.0
  %2982 = vmatpush1.msra.mxu0 %v2953
  %2983 = vmatprep.subr.mxu0 0.0
  %2984 = vmatpush1.msra.mxu0 %v2952
  %2985 = vmatprep.subr.mxu0 0.0
  %2986 = vmatpush1.msra.mxu0 %v2951
  %2987 = vmatprep.subr.mxu0 0.0
  %2988 = vmatpush1.msra.mxu0 %v2950
  %2989 = vmatprep.subr.mxu0 0.0
  %2990 = vmatpush1.msra.mxu0 %v2949
  %2991 = vmatprep.subr.mxu0 0.0
  %2992 = vmatpush1.msra.mxu0 %v2948
  %2993 = vmatprep.subr.mxu0 0.0
  %2994 = vmatpush1.msra.mxu0 %v2947
  %2995 = vmatprep.subr.mxu0 0.0
  %2996 = vmatpush1.msra.mxu0 %v2946
  %2997 = vmatprep.subr.mxu0 0.0
  %2998 = vmatpush1.msra.mxu0 %v2945
  %2999 = vmatprep.subr.mxu0 0.0
  %3000 = vmatpush1.msra.mxu0 %v2944
  %3001 = vmatprep.subr.mxu0 0.0
  %3002 = vmatpush2.msra.mxu0 0.0
  %3003 = vmatprep.subr.mxu0 0.0
  %3004 = vmatpush2.msra.mxu0 0.0
  %3005 = vmatprep.subr.mxu0 0.0
  %3006 = vmatpush2.msra.mxu0 0.0
  %3007 = vmatprep.subr.mxu0 0.0
  %3008 = vmatpush2.msra.mxu0 0.0
  %3009 = vmatprep.subr.mxu0 0.0
  %3010 = vmatpush2.msra.mxu0 0.0
  %3011 = vmatprep.subr.mxu0 0.0
  %3012 = vmatpush2.msra.mxu0 0.0
  %3013 = vmatprep.subr.mxu0 0.0
  %3014 = vmatpush2.msra.mxu0 0.0
  %3015 = vmatprep.subr.mxu0 0.0
  %3016 = vmatpush2.msra.mxu0 0.0
  %3017 = vmatprep.subr.mxu0 0.0
  %3018 = vmatpush2.msra.mxu0 0.0
  %3019 = vmatprep.subr.mxu0 0.0
  %3020 = vmatpush2.msra.mxu0 0.0
  %3021 = vmatprep.subr.mxu0 0.0
  %3022 = vmatpush2.msra.mxu0 0.0
  %3023 = vmatprep.subr.mxu0 0.0
  %3024 = vmatpush2.msra.mxu0 0.0
  %3025 = vmatprep.subr.mxu0 0.0
  %3026 = vmatpush2.msra.mxu0 0.0
  %3027 = vmatprep.subr.mxu0 0.0
  %3028 = vmatpush2.msra.mxu0 0.0
  %3029 = vmatprep.subr.mxu0 0.0
  %3030 = vmatpush2.msra.mxu0 0.0
  %3031 = vmatprep.subr.mxu0 0.0
  %3032 = vmatpush2.msra.mxu0 0.0
  %3033 = vmatprep.mubr.f32.mxu0 0.0
  %3034 = vmatmul.mubr.f32.gmra.mxu0 %v2967
  %v3035 = vpop.f32.mrf.mxu0
  %v3036 = vadd.f32 %v2964, %v3035
  %v3037 = vpop.f32.mrf.mxu0
  %3038 = vdwg.mxu0
  %v3039 = vmax.f32 %v3036, 0.0
  %v3040 = vld [vmem:[%s9] sm:$0xff]
  %v3041 = vld [vmem:[%s9 + $0x8] sm:$0xff]
  %v3042 = vld [vmem:[%s9 + $0x10] sm:$0xff]
  %v3043 = vld [vmem:[%s9 + $0x18] sm:$0xff]
  %v3044 = vld [vmem:[%s9 + $0x20] sm:$0xff]
  %v3045 = vld [vmem:[%s9 + $0x28] sm:$0xff]
  %v3046 = vld [vmem:[%s9 + $0x30] sm:$0xff]
  %v3047 = vld [vmem:[%s9 + $0x38] sm:$0xff]
  %v3048 = vld [vmem:[%s9 + $0x40] sm:$0xff]
  %v3049 = vld [vmem:[%s9 + $0x48] sm:$0xff]
  %v3050 = vld [vmem:[%s9 + $0x50] sm:$0xf]
  %v3051 = vld [vmem:[%s10] sm:$0x1]
  %v3053 = vlaneseq
  %v3054 = vshrl.u32 %v3053, 7
  %v3055 = vsub.s32 0, %v3054
  %v3056 = vrot.slane %v3051, %v3055
  %vm3058 = vcmask 687104
  %v3060 = vsel %vm3058, %v3039, 0
  %vm3062 = vcmask 1043456
  %v3064 = vsel %vm3062, %v3050, 0
  %3066 = vmatprep.subr.mxu0 0.0
  %3067 = vmatpush1.msra.mxu0 0.0
  %3068 = vmatprep.subr.mxu0 0.0
  %3069 = vmatpush1.msra.mxu0 0.0
  %3070 = vmatprep.subr.mxu0 0.0
  %3071 = vmatpush1.msra.mxu0 0.0
  %3072 = vmatprep.subr.mxu0 0.0
  %3073 = vmatpush1.msra.mxu0 0.0
  %3074 = vmatprep.subr.mxu0 0.0
  %3075 = vmatpush1.msra.mxu0 0.0
  %3076 = vmatprep.subr.mxu0 0.0
  %3077 = vmatpush1.msra.mxu0 %v3064
  %3078 = vmatprep.subr.mxu0 0.0
  %3079 = vmatpush1.msra.mxu0 %v3049
  %3080 = vmatprep.subr.mxu0 0.0
  %3081 = vmatpush1.msra.mxu0 %v3048
  %3082 = vmatprep.subr.mxu0 0.0
  %3083 = vmatpush1.msra.mxu0 %v3047
  %3084 = vmatprep.subr.mxu0 0.0
  %3085 = vmatpush1.msra.mxu0 %v3046
  %3086 = vmatprep.subr.mxu0 0.0
  %3087 = vmatpush1.msra.mxu0 %v3045
  %3088 = vmatprep.subr.mxu0 0.0
  %3089 = vmatpush1.msra.mxu0 %v3044
  %3090 = vmatprep.subr.mxu0 0.0
  %3091 = vmatpush1.msra.mxu0 %v3043
  %3092 = vmatprep.subr.mxu0 0.0
  %3093 = vmatpush1.msra.mxu0 %v3042
  %3094 = vmatprep.subr.mxu0 0.0
  %3095 = vmatpush1.msra.mxu0 %v3041
  %3096 = vmatprep.subr.mxu0 0.0
  %3097 = vmatpush1.msra.mxu0 %v3040
  %3098 = vmatprep.subr.mxu0 0.0
  %3099 = vmatpush2.msra.mxu0 0.0
  %3100 = vmatprep.subr.mxu0 0.0
  %3101 = vmatpush2.msra.mxu0 0.0
  %3102 = vmatprep.subr.mxu0 0.0
  %3103 = vmatpush2.msra.mxu0 0.0
  %3104 = vmatprep.subr.mxu0 0.0
  %3105 = vmatpush2.msra.mxu0 0.0
  %3106 = vmatprep.subr.mxu0 0.0
  %3107 = vmatpush2.msra.mxu0 0.0
  %3108 = vmatprep.subr.mxu0 0.0
  %3109 = vmatpush2.msra.mxu0 0.0
  %3110 = vmatprep.subr.mxu0 0.0
  %3111 = vmatpush2.msra.mxu0 0.0
  %3112 = vmatprep.subr.mxu0 0.0
  %3113 = vmatpush2.msra.mxu0 0.0
  %3114 = vmatprep.subr.mxu0 0.0
  %3115 = vmatpush2.msra.mxu0 0.0
  %3116 = vmatprep.subr.mxu0 0.0
  %3117 = vmatpush2.msra.mxu0 0.0
  %3118 = vmatprep.subr.mxu0 0.0
  %3119 = vmatpush2.msra.mxu0 0.0
  %3120 = vmatprep.subr.mxu0 0.0
  %3121 = vmatpush2.msra.mxu0 0.0
  %3122 = vmatprep.subr.mxu0 0.0
  %3123 = vmatpush2.msra.mxu0 0.0
  %3124 = vmatprep.subr.mxu0 0.0
  %3125 = vmatpush2.msra.mxu0 0.0
  %3126 = vmatprep.subr.mxu0 0.0
  %3127 = vmatpush2.msra.mxu0 0.0
  %3128 = vmatprep.subr.mxu0 0.0
  %3129 = vmatpush2.msra.mxu0 0.0
  %3130 = vmatprep.mubr.f32.mxu0 0.0
  %3131 = vmatmul.mubr.f32.gmra.mxu0 %v3060
  %v3132 = vpop.f32.mrf.mxu0
  %v3133 = vadd.f32 %v3056, %v3132
  %v3134 = vpop.f32.mrf.mxu0
  %3135 = vdwg.mxu0
  %3136 = vst [vmem:[%s11] sm:$0xff] %v3133
  // Predicated region
  $region46: #{lenet_forward.1} parent=0 // pred_check
    _
  $region47: #{lenet_forward.1} parent=0 // pred_check_branch
    %3138 = sbr.rel (0) target = $region49
  $region48: #{lenet_forward.1} parent=0 // pred_region
    _
  $region49: #{lenet_forward.1} parent=0 // pred_fallthru
    _
  // Predicated region
  $region50: #{lenet_forward.1} parent=0 // pred_check
    _
  $region51: #{lenet_forward.1} parent=0 // pred_check_branch
    %3140 = sbr.rel (0) target = $region53
  $region52: #{lenet_forward.1} parent=0 // pred_region
    _
  $region53: #{lenet_forward.1} parent=0 // pred_fallthru
    _

</llo_original>
